<compile_context>
chip_gen: v5e
topology: v5e:2x2
jax: 0.10.0
libtpu: 0.0.40
codegen_flags: <defaults>
</compile_context>

<pallas_src>
import functools

import jax
import jax.numpy as jnp
import numpy as np
from jax import lax
from jax.experimental import pallas as pl
from jax.experimental.pallas import tpu as pltpu


def _convdw_kernel(x_ref, wdw_ref, b1_ref, wpw_ref, b2_ref, o_ref, *,
                   stride, block_rows, out_w):
    """One (batch, output-row-block) tile per grid step.

    x_ref   : (Hp, Wp, Cp)      whole padded image of this batch element
                                (VMEM-resident across the row-block axis)
    wdw_ref : (9, Cp)           depthwise 3x3 weights, BN1 scale folded in (f32)
    b1_ref  : (1, Cp)           folded BN1 bias (incl. dw-conv bias)
    wpw_ref : (Cp, Cop)         pointwise weights, BN2 scale folded in (bf16)
    b2_ref  : (1, Cop)          folded BN2 bias (incl. pw-conv bias)
    o_ref   : (R*Wo, Cop)       lane-dense output block
    """
    s, R, Wo = stride, block_rows, out_w
    Cp = x_ref.shape[-1]
    rb = pl.program_id(1)
    r0 = pl.multiple_of(rb * (R * s), R * s)      # first padded input row of this block

    wdw = wdw_ref[...]                            # (9, Cp) f32
    b1 = b1_ref[...]                              # (1, Cp) f32

    if s == 1:
        xv = x_ref[pl.ds(r0, R + 2)]              # (R+2, Wp, Cp) slab
        def tap(a, b):
            return xv[a:a + R, b:b + Wo, :]
    elif s == 2:
        # Decimate rows / columns once per parity (even/odd) instead of once
        # per tap; every tap is then a cheap contiguous slice.
        slab = x_ref[pl.ds(r0, 2 * R + 2)]        # (2R+2, Wp, Cp), Wp = 2*(Wo+1)
        ce = slab[:, :2 * (Wo + 1), :].reshape(2 * R + 2, Wo + 1, 2, Cp)[:, :, 0, :]
        co = slab[:, 1:1 + 2 * Wo, :].reshape(2 * R + 2, Wo, 2, Cp)[:, :, 0, :]

        def _even_rows(v, n):
            return v[:2 * n].reshape(n, 2, v.shape[1], Cp)[:, 0]

        def _odd_rows(v, n):
            return v[1:1 + 2 * n].reshape(n, 2, v.shape[1], Cp)[:, 0]

        ee, eo = _even_rows(ce, R + 1), _even_rows(co, R + 1)   # rows 0,2,...
        oe, oo = _odd_rows(ce, R), _odd_rows(co, R)             # rows 1,3,...

        def tap(a, b):
            r_lo = 1 if a == 2 else 0
            even_rows = (a != 1)
            if b == 1:                               # odd columns
                v = eo if even_rows else oo
                return v[r_lo:r_lo + R]
            v = ee if even_rows else oe              # even columns
            c_lo = 1 if b == 2 else 0
            return v[r_lo:r_lo + R, c_lo:c_lo + Wo, :]
    else:
        raise NotImplementedError("MobileNetV1 only uses stride 1 or 2")

    # 3x3 depthwise conv with the folded BN1 bias fused into the first MAC
    # (no zeros-init pass, no per-tap casts; f32 VPU accumulation on all gens).
    acc = tap(0, 0) * wdw[0] + b1
    for a in range(3):
        for b in range(3):
            if a == 0 and b == 0:
                continue
            acc = acc + tap(a, b) * wdw[3 * a + b]
    y1 = jnp.maximum(acc, 0.0)                       # (R, Wo, Cp) f32

    # 1x1 pointwise conv == (R*Wo, Cp) x (Cp, Cop) matmul: bf16 MXU operands,
    # f32 accumulation.
    z = jnp.dot(y1.reshape(R * Wo, Cp).astype(wpw_ref.dtype), wpw_ref[...],
                preferred_element_type=jnp.float32)

    # BN2 bias (scale folded into wpw) + ReLU; lane-dense (Cop % 128 == 0) store.
    o_ref[...] = jnp.maximum(z + b2_ref[...], 0.0).astype(o_ref.dtype)


def _round_up(x, m):
    return ((x + m - 1) // m) * m


def _choose_block_rows(ho, wo, n_batch, *, target_m=512):
    """Pick the output-row block size R (a divisor of Ho).

    R no longer controls input VMEM (the whole image is resident); it sets the
    pointwise-matmul M dim (R*Wo) and the grid-step count.  Keep R*Wo
    reasonably large, but guarantee >= 2 total grid steps whenever possible so
    both v7x TensorCores get work and input/output DMAs can pipeline.
    """
    divisors = [d for d in range(1, ho + 1) if ho % d == 0]
    fits = [d for d in divisors if d * wo <= target_m] or [1]
    r = max(fits)
    if n_batch * (ho // r) < 2:
        smaller = [d for d in divisors if d < r]
        if smaller:
            r = max(smaller)
    return r


def _vmem_limit_bytes():
    """Per-generation VMEM limit with headroom for compiler scratch."""
    try:
        cap = pltpu.get_tpu_info().vmem_capacity_bytes
    except Exception:  # conservative fallback, safe on every generation
        cap = 64 * 1024 * 1024
    # ~48 MiB on v7x (64 MiB physical), 64 MiB on v5e/v6e (128 MiB physical).
    return int(min(cap - 16 * 1024 * 1024, 64 * 1024 * 1024))


def conv_dw_block_nhwc(x_nhwc, params, stride, *, out_dtype=None):
    """ConvDwBlock on NHWC activations (preferred entry point for chaining).

    Returns NHWC output with channels padded to a multiple of 128 (padded
    channels are exact zeros), so consecutive blocks chain without any
    transpose / re-pad of the channel dimension.
    """
    wdw, b1, wpw, b2 = params            # BN scales already folded into weights
    N, H, W, Cin = x_nhwc.shape
    Cout = wpw.shape[1]
    # TODO(synk): odd spatial sizes (PyTorch floor semantics) not supported.
    assert H % stride == 0 and W % stride == 0, "spatial dims must divide stride"
    Ho, Wo = H // stride, W // stride

    Cp = _round_up(Cin, 128)             # lane-dense / MXU-friendly channels
    Cop = _round_up(Cout, 128)
    R = _choose_block_rows(Ho, Wo, N)
    nrb = Ho // R
    Hp, Wp = H + 2, W + 2
    out_dtype = x_nhwc.dtype if out_dtype is None else out_dtype

    # Single fused pad (spatial halo + channel pad) -> exactly one extra HBM
    # pass before the kernel; the kernel reads the padded image once per batch.
    xp = jnp.pad(x_nhwc, ((0, 0), (1, 1), (1, 1), (0, Cp - Cin)))

    # BN-folded weights / biases, padded to the lane-aligned channel counts.
    wdw_p = jnp.pad(wdw, ((0, 0), (0, 0), (0, Cp - Cin))).reshape(9, Cp)
    b1_p = jnp.pad(b1, (0, Cp - Cin)).reshape(1, Cp)
    wpw_p = jnp.pad(wpw, ((0, Cp - Cin), (0, Cop - Cout))).astype(jnp.bfloat16)
    b2_p = jnp.pad(b2, (0, Cop - Cout)).reshape(1, Cop)

    kernel = functools.partial(_convdw_kernel, stride=stride, block_rows=R,
                               out_w=Wo)
    out = pl.pallas_call(
        kernel,
        out_shape=jax.ShapeDtypeStruct((N, nrb, R * Wo, Cop), out_dtype),
        grid=(N, nrb),
        in_specs=[
            # Whole padded image per batch element; block index is constant
            # along the row-block axis -> loaded from HBM once per image and
            # kept resident while all of its row-blocks are computed.
            pl.BlockSpec((None, Hp, Wp, Cp), lambda n, rb: (n, 0, 0, 0)),
            pl.BlockSpec((9, Cp), lambda n, rb: (0, 0)),
            pl.BlockSpec((1, Cp), lambda n, rb: (0, 0)),
            pl.BlockSpec((Cp, Cop), lambda n, rb: (0, 0)),
            pl.BlockSpec((1, Cop), lambda n, rb: (0, 0)),
        ],
        out_specs=pl.BlockSpec((None, None, R * Wo, Cop),
                               lambda n, rb: (n, rb, 0, 0)),
        compiler_params=pltpu.CompilerParams(
            dimension_semantics=("parallel", "parallel"),
            vmem_limit_bytes=_vmem_limit_bytes()),
    )(xp, wdw_p, b1_p, wpw_p, b2_p)

    # (N, nrb, R*Wo, Cop) -> (N, Ho, Wo, Cop): layout-only reshape (row blocks
    # are contiguous along Ho), no transpose, padded channels kept for chaining.
    return out.reshape(N, Ho, Wo, Cop)


def conv_dw_block(x_nchw, params, stride):
    """NCHW convenience wrapper matching the PyTorch module interface.

    NOTE: in a full network keep activations NHWC / channel-padded between
    blocks and call conv_dw_block_nhwc directly -- the transposes and the
    channel slice below exist only to match the PyTorch NCHW interface of
    this standalone test.
    """
    Cout = params[2].shape[1]
    x = jnp.transpose(x_nchw, (0, 2, 3, 1))
    out = conv_dw_block_nhwc(x, params, stride)[..., :Cout]
    return jnp.transpose(out, (0, 3, 1, 2))


def init_params(key, cin, cout):
    """Deterministic synthetic parameters (shapes match the PyTorch module)."""
    ks = jax.random.split(key, 12)
    eps = 1e-5
    # depthwise conv: torch weight (cin,1,3,3) -> stored as (3,3,cin)
    wdw = 0.2 * jax.random.normal(ks[0], (3, 3, cin), jnp.float32)
    bdw = 0.1 * jax.random.normal(ks[1], (cin,), jnp.float32)
    g1 = 1.0 + 0.1 * jax.random.normal(ks[2], (cin,), jnp.float32)
    be1 = 0.1 * jax.random.normal(ks[3], (cin,), jnp.float32)
    m1 = 0.1 * jax.random.normal(ks[4], (cin,), jnp.float32)
    v1 = jax.random.uniform(ks[5], (cin,), jnp.float32, 0.5, 1.5)
    # pointwise conv: torch weight (cout,cin,1,1) -> stored as (cin,cout)
    wpw = 0.2 * jax.random.normal(ks[6], (cin, cout), jnp.float32)
    bpw = 0.1 * jax.random.normal(ks[7], (cout,), jnp.float32)
    g2 = 1.0 + 0.1 * jax.random.normal(ks[8], (cout,), jnp.float32)
    be2 = 0.1 * jax.random.normal(ks[9], (cout,), jnp.float32)
    m2 = 0.1 * jax.random.normal(ks[10], (cout,), jnp.float32)
    v2 = jax.random.uniform(ks[11], (cout,), jnp.float32, 0.5, 1.5)

    # Fold conv bias + inference BatchNorm.  Scales are folded straight into
    # the conv weights so the kernel only does bias + ReLU.
    s1 = g1 / jnp.sqrt(v1 + eps)
    b1 = be1 + (bdw - m1) * s1
    s2 = g2 / jnp.sqrt(v2 + eps)
    b2 = be2 + (bpw - m2) * s2
    return (wdw * s1, b1, wpw * s2[None, :], b2)


def ref_forward(x_nchw, params, stride):
    """Pure-JAX f32 reference (same folded semantics, independent lowering)."""
    wdw, b1, wpw, b2 = params
    x = jnp.transpose(x_nchw, (0, 2, 3, 1)).astype(jnp.float32)
    cin = x.shape[-1]
    y = lax.conv_general_dilated(
        x, wdw[:, :, None, :], window_strides=(stride, stride),
        padding=((1, 1), (1, 1)),
        dimension_numbers=("NHWC", "HWIO", "NHWC"), feature_group_count=cin)
    y = jnp.maximum(y + b1, 0.0)
    z = jnp.einsum("nhwc,co->nhwo", y, wpw)
    z = jnp.maximum(z + b2, 0.0)
    return jnp.transpose(z, (0, 3, 1, 2))


if __name__ == "__main__":
    key = jax.random.PRNGKey(0)
    kx, kp = jax.random.split(key)

    configs = [
        (2, 4, 16, 16, 8),     # nrb == 1 path (whole image in one row-block)
        (1, 8, 16, 16, 16),    # nrb > 1 path (multiple row-blocks, dynamic r0)
    ]
    for (N, Cin, H, W, Cout) in configs:
        x = jax.random.normal(kx, (N, Cin, H, W), jnp.float32)
        params = init_params(kp, Cin, Cout)
        for stride in (1, 2):
            out = jax.block_until_ready(conv_dw_block(x, params, stride))
            ref = ref_forward(x, params, stride)
            # bf16 MXU operands (f32 accumulate) vs. an all-f32 reference.
            np.testing.assert_allclose(np.asarray(out), np.asarray(ref),
                                       rtol=2e-2, atol=2e-2)
    print("KERNEL_OK")
</pallas_src>

<mosaic_0001>
module attributes {stable_mosaic.version = 11 : i64} {
  func.func @_convdw_kernel(%arg0: i32, %arg1: i32, %arg2: memref<1x18x18x128xf32, #tpu.memory_space<vmem>>, %arg3: memref<9x128xf32, #tpu.memory_space<vmem>>, %arg4: memref<1x128xf32, #tpu.memory_space<vmem>>, %arg5: memref<128x128xbf16, #tpu.memory_space<vmem>>, %arg6: memref<1x128xf32, #tpu.memory_space<vmem>>, %arg7: memref<1x1x256x128xf32, #tpu.memory_space<vmem>>) attributes {dimension_semantics = [#tpu.dimension_semantics<parallel>, #tpu.dimension_semantics<parallel>], iteration_bounds = array<i64: 2, 1>, scalar_prefetch = 0 : i64, scratch_operands = 0 : i64, tpu.core_type = #tpu.core_type<tc>, window_params = [{transform_indices = @transform_0, window_bounds = array<i64: 1, 18, 18, 128>}, {pipeline_mode = #tpu.pipeline_mode<synchronous>, transform_indices = @transform_1, window_bounds = array<i64: 9, 128>}, {pipeline_mode = #tpu.pipeline_mode<synchronous>, transform_indices = @transform_2, window_bounds = array<i64: 1, 128>}, {pipeline_mode = #tpu.pipeline_mode<synchronous>, transform_indices = @transform_3, window_bounds = array<i64: 128, 128>}, {pipeline_mode = #tpu.pipeline_mode<synchronous>, transform_indices = @transform_4, window_bounds = array<i64: 1, 128>}, {transform_indices = @transform_5, window_bounds = array<i64: 1, 1, 256, 128>}]} {
    %c16_i32 = arith.constant 16 : i32
    %0 = arith.muli %arg1, %c16_i32 : i32
    %1 = tpu.assume_multiple %0, 16 : i32
    %c0 = arith.constant 0 : index
    %c0_0 = arith.constant 0 : index
    %2 = vector.load %arg3[%c0, %c0_0] : memref<9x128xf32, #tpu.memory_space<vmem>>, vector<9x128xf32>
    %c0_1 = arith.constant 0 : index
    %c0_2 = arith.constant 0 : index
    %3 = vector.load %arg4[%c0_1, %c0_2] : memref<1x128xf32, #tpu.memory_space<vmem>>, vector<1x128xf32>
    %c0_3 = arith.constant 0 : index
    %4 = arith.index_cast %1 : i32 to index
    %c0_4 = arith.constant 0 : index
    %c0_5 = arith.constant 0 : index
    %5 = vector.load %arg2[%c0_3, %4, %c0_4, %c0_5] : memref<1x18x18x128xf32, #tpu.memory_space<vmem>>, vector<1x18x18x128xf32>
    %6 = vector.shape_cast %5 : vector<1x18x18x128xf32> to vector<18x18x128xf32>
    %7 = vector.extract_strided_slice %6 {offsets = [0, 0, 0], sizes = [16, 16, 128], strides = [1, 1, 1]} : vector<18x18x128xf32> to vector<16x16x128xf32>
    %8 = vector.extract_strided_slice %2 {offsets = [0, 0], sizes = [1, 128], strides = [1, 1]} : vector<9x128xf32> to vector<1x128xf32>
    %9 = vector.shape_cast %8 : vector<1x128xf32> to vector<128xf32>
    %10 = vector.shape_cast %9 : vector<128xf32> to vector<1x1x128xf32>
    %11 = vector.broadcast %10 : vector<1x1x128xf32> to vector<16x16x128xf32>
    %12 = arith.mulf %7, %11 : vector<16x16x128xf32>
    %13 = vector.shape_cast %3 : vector<1x128xf32> to vector<1x1x128xf32>
    %14 = vector.broadcast %13 : vector<1x1x128xf32> to vector<16x16x128xf32>
    %15 = arith.addf %12, %14 : vector<16x16x128xf32>
    %16 = vector.extract_strided_slice %6 {offsets = [0, 1, 0], sizes = [16, 16, 128], strides = [1, 1, 1]} : vector<18x18x128xf32> to vector<16x16x128xf32>
    %17 = vector.extract_strided_slice %2 {offsets = [1, 0], sizes = [1, 128], strides = [1, 1]} : vector<9x128xf32> to vector<1x128xf32>
    %18 = vector.shape_cast %17 : vector<1x128xf32> to vector<128xf32>
    %19 = vector.shape_cast %18 : vector<128xf32> to vector<1x1x128xf32>
    %20 = vector.broadcast %19 : vector<1x1x128xf32> to vector<16x16x128xf32>
    %21 = arith.mulf %16, %20 : vector<16x16x128xf32>
    %22 = arith.addf %15, %21 : vector<16x16x128xf32>
    %23 = vector.extract_strided_slice %6 {offsets = [0, 2, 0], sizes = [16, 16, 128], strides = [1, 1, 1]} : vector<18x18x128xf32> to vector<16x16x128xf32>
    %24 = vector.extract_strided_slice %2 {offsets = [2, 0], sizes = [1, 128], strides = [1, 1]} : vector<9x128xf32> to vector<1x128xf32>
    %25 = vector.shape_cast %24 : vector<1x128xf32> to vector<128xf32>
    %26 = vector.shape_cast %25 : vector<128xf32> to vector<1x1x128xf32>
    %27 = vector.broadcast %26 : vector<1x1x128xf32> to vector<16x16x128xf32>
    %28 = arith.mulf %23, %27 : vector<16x16x128xf32>
    %29 = arith.addf %22, %28 : vector<16x16x128xf32>
    %30 = vector.extract_strided_slice %6 {offsets = [1, 0, 0], sizes = [16, 16, 128], strides = [1, 1, 1]} : vector<18x18x128xf32> to vector<16x16x128xf32>
    %31 = vector.extract_strided_slice %2 {offsets = [3, 0], sizes = [1, 128], strides = [1, 1]} : vector<9x128xf32> to vector<1x128xf32>
    %32 = vector.shape_cast %31 : vector<1x128xf32> to vector<128xf32>
    %33 = vector.shape_cast %32 : vector<128xf32> to vector<1x1x128xf32>
    %34 = vector.broadcast %33 : vector<1x1x128xf32> to vector<16x16x128xf32>
    %35 = arith.mulf %30, %34 : vector<16x16x128xf32>
    %36 = arith.addf %29, %35 : vector<16x16x128xf32>
    %37 = vector.extract_strided_slice %6 {offsets = [1, 1, 0], sizes = [16, 16, 128], strides = [1, 1, 1]} : vector<18x18x128xf32> to vector<16x16x128xf32>
    %38 = vector.extract_strided_slice %2 {offsets = [4, 0], sizes = [1, 128], strides = [1, 1]} : vector<9x128xf32> to vector<1x128xf32>
    %39 = vector.shape_cast %38 : vector<1x128xf32> to vector<128xf32>
    %40 = vector.shape_cast %39 : vector<128xf32> to vector<1x1x128xf32>
    %41 = vector.broadcast %40 : vector<1x1x128xf32> to vector<16x16x128xf32>
    %42 = arith.mulf %37, %41 : vector<16x16x128xf32>
    %43 = arith.addf %36, %42 : vector<16x16x128xf32>
    %44 = vector.extract_strided_slice %6 {offsets = [1, 2, 0], sizes = [16, 16, 128], strides = [1, 1, 1]} : vector<18x18x128xf32> to vector<16x16x128xf32>
    %45 = vector.extract_strided_slice %2 {offsets = [5, 0], sizes = [1, 128], strides = [1, 1]} : vector<9x128xf32> to vector<1x128xf32>
    %46 = vector.shape_cast %45 : vector<1x128xf32> to vector<128xf32>
    %47 = vector.shape_cast %46 : vector<128xf32> to vector<1x1x128xf32>
    %48 = vector.broadcast %47 : vector<1x1x128xf32> to vector<16x16x128xf32>
    %49 = arith.mulf %44, %48 : vector<16x16x128xf32>
    %50 = arith.addf %43, %49 : vector<16x16x128xf32>
    %51 = vector.extract_strided_slice %6 {offsets = [2, 0, 0], sizes = [16, 16, 128], strides = [1, 1, 1]} : vector<18x18x128xf32> to vector<16x16x128xf32>
    %52 = vector.extract_strided_slice %2 {offsets = [6, 0], sizes = [1, 128], strides = [1, 1]} : vector<9x128xf32> to vector<1x128xf32>
    %53 = vector.shape_cast %52 : vector<1x128xf32> to vector<128xf32>
    %54 = vector.shape_cast %53 : vector<128xf32> to vector<1x1x128xf32>
    %55 = vector.broadcast %54 : vector<1x1x128xf32> to vector<16x16x128xf32>
    %56 = arith.mulf %51, %55 : vector<16x16x128xf32>
    %57 = arith.addf %50, %56 : vector<16x16x128xf32>
    %58 = vector.extract_strided_slice %6 {offsets = [2, 1, 0], sizes = [16, 16, 128], strides = [1, 1, 1]} : vector<18x18x128xf32> to vector<16x16x128xf32>
    %59 = vector.extract_strided_slice %2 {offsets = [7, 0], sizes = [1, 128], strides = [1, 1]} : vector<9x128xf32> to vector<1x128xf32>
    %60 = vector.shape_cast %59 : vector<1x128xf32> to vector<128xf32>
    %61 = vector.shape_cast %60 : vector<128xf32> to vector<1x1x128xf32>
    %62 = vector.broadcast %61 : vector<1x1x128xf32> to vector<16x16x128xf32>
    %63 = arith.mulf %58, %62 : vector<16x16x128xf32>
    %64 = arith.addf %57, %63 : vector<16x16x128xf32>
    %65 = vector.extract_strided_slice %6 {offsets = [2, 2, 0], sizes = [16, 16, 128], strides = [1, 1, 1]} : vector<18x18x128xf32> to vector<16x16x128xf32>
    %66 = vector.extract_strided_slice %2 {offsets = [8, 0], sizes = [1, 128], strides = [1, 1]} : vector<9x128xf32> to vector<1x128xf32>
    %67 = vector.shape_cast %66 : vector<1x128xf32> to vector<128xf32>
    %68 = vector.shape_cast %67 : vector<128xf32> to vector<1x1x128xf32>
    %69 = vector.broadcast %68 : vector<1x1x128xf32> to vector<16x16x128xf32>
    %70 = arith.mulf %65, %69 : vector<16x16x128xf32>
    %71 = arith.addf %64, %70 : vector<16x16x128xf32>
    %cst = arith.constant 0.000000e+00 : f32
    %72 = vector.broadcast %cst : f32 to vector<16x16x128xf32>
    %73 = arith.maximumf %71, %72 : vector<16x16x128xf32>
    %74 = vector.shape_cast %73 : vector<16x16x128xf32> to vector<256x128xf32>
    %75 = arith.truncf %74 : vector<256x128xf32> to vector<256x128xbf16>
    %c0_6 = arith.constant 0 : index
    %c0_7 = arith.constant 0 : index
    %76 = vector.load %arg5[%c0_6, %c0_7] : memref<128x128xbf16, #tpu.memory_space<vmem>>, vector<128x128xbf16>
    %cst_8 = arith.constant dense<0.000000e+00> : vector<256x128xf32>
    %77 = tpu.matmul %75, %76, %cst_8 {dimension_numbers = #tpu.dot_dimension_numbers<[1], [0], [0], [1], [0, 0, 1, 1], [], []>} : vector<256x128xbf16>, vector<128x128xbf16>, vector<256x128xf32> -> vector<256x128xf32>
    %c0_9 = arith.constant 0 : index
    %c0_10 = arith.constant 0 : index
    %78 = vector.load %arg6[%c0_9, %c0_10] : memref<1x128xf32, #tpu.memory_space<vmem>>, vector<1x128xf32>
    %79 = vector.broadcast %78 : vector<1x128xf32> to vector<256x128xf32>
    %80 = arith.addf %77, %79 : vector<256x128xf32>
    %cst_11 = arith.constant 0.000000e+00 : f32
    %81 = vector.broadcast %cst_11 : f32 to vector<256x128xf32>
    %82 = arith.maximumf %80, %81 : vector<256x128xf32>
    %c0_12 = arith.constant 0 : index
    %c0_13 = arith.constant 0 : index
    %c0_14 = arith.constant 0 : index
    %c0_15 = arith.constant 0 : index
    %83 = vector.load %arg7[%c0_12, %c0_13, %c0_14, %c0_15] : memref<1x1x256x128xf32, #tpu.memory_space<vmem>>, vector<1x1x256x128xf32>
    %84 = vector.shape_cast %83 : vector<1x1x256x128xf32> to vector<256x128xf32>
    %85 = vector.shape_cast %82 : vector<256x128xf32> to vector<1x1x256x128xf32>
    tpu.vector_store %arg7[%c0_12, %c0_13, %c0_14, %c0_15], %85 {strides = array<i32>} : memref<1x1x256x128xf32, #tpu.memory_space<vmem>>, vector<1x1x256x128xf32>,
    return
  }
  func.func @transform_0(%arg0: i32, %arg1: i32) -> (i32, i32, i32, i32) {
    %c0_i32 = arith.constant 0 : i32
    %c0_i32_0 = arith.constant 0 : i32
    %c0_i32_1 = arith.constant 0 : i32
    %c0_i32_2 = arith.constant 0 : i32
    return %arg0, %c0_i32, %c0_i32_0, %c0_i32_1 : i32, i32, i32, i32
  }
  func.func @transform_1(%arg0: i32, %arg1: i32) -> (i32, i32) {
    %c0_i32 = arith.constant 0 : i32
    %c0_i32_0 = arith.constant 0 : i32
    %c0_i32_1 = arith.constant 0 : i32
    return %c0_i32, %c0_i32_0 : i32, i32
  }
  func.func @transform_2(%arg0: i32, %arg1: i32) -> (i32, i32) {
    %c0_i32 = arith.constant 0 : i32
    %c0_i32_0 = arith.constant 0 : i32
    %c0_i32_1 = arith.constant 0 : i32
    return %c0_i32, %c0_i32_0 : i32, i32
  }
  func.func @transform_3(%arg0: i32, %arg1: i32) -> (i32, i32) {
    %c0_i32 = arith.constant 0 : i32
    %c0_i32_0 = arith.constant 0 : i32
    %c0_i32_1 = arith.constant 0 : i32
    return %c0_i32, %c0_i32_0 : i32, i32
  }
  func.func @transform_4(%arg0: i32, %arg1: i32) -> (i32, i32) {
    %c0_i32 = arith.constant 0 : i32
    %c0_i32_0 = arith.constant 0 : i32
    %c0_i32_1 = arith.constant 0 : i32
    return %c0_i32, %c0_i32_0 : i32, i32
  }
  func.func @transform_5(%arg0: i32, %arg1: i32) -> (i32, i32, i32, i32) {
    %c0_i32 = arith.constant 0 : i32
    %c0_i32_0 = arith.constant 0 : i32
    %c0_i32_1 = arith.constant 0 : i32
    return %arg0, %arg1, %c0_i32, %c0_i32_0 : i32, i32, i32, i32
  }
}

</mosaic_0001>

<llo_original>
// kernel: tpu_custom_call.1
$region0: #{tpu_custom_call.1}
  #allocation0 [shape = 'u32[]', space=smem, size = 0x4, offset = 0x4, fixed_abs, tag = 'smem constant byte address 0x4 - core index']
  #allocation1 [shape = 'u32[72,128]{1,0:T(1,128)}', space=vmem, size = 0x9000, scoped, tag = 'internal scratch']
  %s0 = inlined_call_operand.vmem [shape: f32[2,18,18,128], index: 0, kind: input, shape index: {}]
  %s1 = inlined_call_operand.vmem [shape: f32[9,128], index: 1, kind: input, shape index: {}]
  %s2 = inlined_call_operand.vmem [shape: f32[1,128], index: 2, kind: input, shape index: {}]
  %s3 = inlined_call_operand.vmem [shape: bf16[128,128], index: 3, kind: input, shape index: {}]
  %s4 = inlined_call_operand.vmem [shape: f32[1,128], index: 4, kind: input, shape index: {}]
  %s5 = inlined_call_operand.hbm [shape: f32[2,1,256,128], index: 5, kind: output, shape index: {}]
  %s6 = sld [smem:[#allocation0]]
  $region53: #{tpu_custom_call.1} parent=0
    _
  %s8 = ssub.s32 1, %s6
  %s9 = scalar_select 0, %s8, %s6
  $region1: #{tpu_custom_call.1} parent=0
    #allocation2 [shape = 'u8[262144]{0}', space=vmem, size = 0x40000, scoped, tag = 'output window, operand 0']
    #allocation3 [shape = 's32[2]{0}', space=sflag, size = 0x8, scoped, tag = 'scoped memory for tpu_custom_call.1']
    %10 = vsyncpa [#allocation3], 0
    %s11 = scalar_lea.sflag [#allocation3], 1
    %12 = vsyncpa %s11, 0
    loop: start=0, step=1, limit=4
    $region2: #{tpu_custom_call.1} parent=1 // loop_pre_header
      _
    $region3: #{tpu_custom_call.1} parent=1 // loop_header
      %s14 = sphi 0, %s18
      %p15 = scmp.ge.s32.totalorder %s14, 4
      %s21 = sphi 0, %s33
      %s22 = sphi 0, %s29
      %s23 = sphi 0, %s21
      %s24 = sphi 0, %s22
      %s25 = sphi 0, %s23
      %s26 = sphi 0, %s24
      %s36 = sphi 0, %s38
      %s39 = sphi 0, %s36
      %s40 = sphi 0, %s39
      %s56 = sphi 0, %s40
      %s60 = sphi 0, %s60
      %s62 = sphi 0, %s60
      %s63 = sphi 0, %s62
      %s77 = sphi 0, %s63
      %s81 = sphi 0, %s81
      %s83 = sphi 0, %s81
      %s84 = sphi 0, %s83
      %s98 = sphi 0, %s84
      %s102 = sphi 0, %s102
      %s104 = sphi 0, %s102
      %s105 = sphi 0, %s104
      %s119 = sphi 0, %s105
      %s123 = sphi 0, %s123
      %s125 = sphi 0, %s123
      %s126 = sphi 0, %s125
      %s140 = sphi 0, %s126
      %s148 = sphi 0, %s150
      %s151 = sphi 0, %s148
      %s152 = sphi 0, %s151
      %s168 = sphi 0, %s152
    $region4: #{tpu_custom_call.1} parent=1 // loop_header_branch
      %17 = sbr.rel (%p15) target = $region8
    $region5: #{tpu_custom_call.1} parent=1 // loop_body
      %s19 = ssub.s32 %s14, 1
      %s20 = ssub.s32 %s14, 2
      %s27 = sadd.s32 1, %s22
      %p28 = scmp.ge.s32.totalorder %s27, 1
      %s29 = scalar_select %p28, 0, %s27
      %s30 = sadd.s32 1, %s21
      %s31 = scalar_select %p28, %s30, %s21
      %p32 = scmp.ge.s32.totalorder %s31, 2
      %s33 = scalar_select %p32, 0, %s31
      %s34 = ssub.s32 %s21, %s33
      %p35 = scmp.eq.s32.totalorder %s34, 0
      %s37 = sadd.s32 %s36, 1
      %s38 = scalar_select %p35, %s36, %s37
      %p41 = pneg %p35
      %p42 = scmp.eq.s32.totalorder %s14, 1
      %p43 = por %p41, %p42
      %p44 = scmp.ne.s32.totalorder %s36, %s39
      %p45 = scmp.eq.s32.totalorder %s14, 0
      %p46 = por %p44, %p45
      %p47 = scmp.ne.s32.totalorder %s36, %s39
      %p48 = scmp.eq.s32.totalorder %s19, 1
      %p49 = por %p47, %p48
      %p50 = scmp.ne.s32.totalorder %s39, %s40
      %p51 = scmp.eq.s32.totalorder %s19, 0
      %p52 = por %p50, %p51
      %p53 = scmp.ne.s32.totalorder %s39, %s40
      %p54 = scmp.eq.s32.totalorder %s20, 1
      %p55 = por %p53, %p54
      %p57 = scmp.ne.s32.totalorder %s40, %s56
      %p58 = scmp.eq.s32.totalorder %s20, 0
      %p59 = por %p57, %p58
      %s61 = sadd.s32 %s60, 1
      %p64 = scmp.eq.s32.totalorder %s14, 1
      %p65 = scmp.ne.s32.totalorder %s60, %s62
      %p66 = scmp.eq.s32.totalorder %s14, 0
      %p67 = por %p65, %p66
      %p68 = scmp.ne.s32.totalorder %s60, %s62
      %p69 = scmp.eq.s32.totalorder %s19, 1
      %p70 = por %p68, %p69
      %p71 = scmp.ne.s32.totalorder %s62, %s63
      %p72 = scmp.eq.s32.totalorder %s19, 0
      %p73 = por %p71, %p72
      %p74 = scmp.ne.s32.totalorder %s62, %s63
      %p75 = scmp.eq.s32.totalorder %s20, 1
      %p76 = por %p74, %p75
      %p78 = scmp.ne.s32.totalorder %s63, %s77
      %p79 = scmp.eq.s32.totalorder %s20, 0
      %p80 = por %p78, %p79
      %s82 = sadd.s32 %s81, 1
      %p85 = scmp.eq.s32.totalorder %s14, 1
      %p86 = scmp.ne.s32.totalorder %s81, %s83
      %p87 = scmp.eq.s32.totalorder %s14, 0
      %p88 = por %p86, %p87
      %p89 = scmp.ne.s32.totalorder %s81, %s83
      %p90 = scmp.eq.s32.totalorder %s19, 1
      %p91 = por %p89, %p90
      %p92 = scmp.ne.s32.totalorder %s83, %s84
      %p93 = scmp.eq.s32.totalorder %s19, 0
      %p94 = por %p92, %p93
      %p95 = scmp.ne.s32.totalorder %s83, %s84
      %p96 = scmp.eq.s32.totalorder %s20, 1
      %p97 = por %p95, %p96
      %p99 = scmp.ne.s32.totalorder %s84, %s98
      %p100 = scmp.eq.s32.totalorder %s20, 0
      %p101 = por %p99, %p100
      %s103 = sadd.s32 %s102, 1
      %p106 = scmp.eq.s32.totalorder %s14, 1
      %p107 = scmp.ne.s32.totalorder %s102, %s104
      %p108 = scmp.eq.s32.totalorder %s14, 0
      %p109 = por %p107, %p108
      %p110 = scmp.ne.s32.totalorder %s102, %s104
      %p111 = scmp.eq.s32.totalorder %s19, 1
      %p112 = por %p110, %p111
      %p113 = scmp.ne.s32.totalorder %s104, %s105
      %p114 = scmp.eq.s32.totalorder %s19, 0
      %p115 = por %p113, %p114
      %p116 = scmp.ne.s32.totalorder %s104, %s105
      %p117 = scmp.eq.s32.totalorder %s20, 1
      %p118 = por %p116, %p117
      %p120 = scmp.ne.s32.totalorder %s105, %s119
      %p121 = scmp.eq.s32.totalorder %s20, 0
      %p122 = por %p120, %p121
      %s124 = sadd.s32 %s123, 1
      %p127 = scmp.eq.s32.totalorder %s14, 1
      %p128 = scmp.ne.s32.totalorder %s123, %s125
      %p129 = scmp.eq.s32.totalorder %s14, 0
      %p130 = por %p128, %p129
      %p131 = scmp.ne.s32.totalorder %s123, %s125
      %p132 = scmp.eq.s32.totalorder %s19, 1
      %p133 = por %p131, %p132
      %p134 = scmp.ne.s32.totalorder %s125, %s126
      %p135 = scmp.eq.s32.totalorder %s19, 0
      %p136 = por %p134, %p135
      %p137 = scmp.ne.s32.totalorder %s125, %s126
      %p138 = scmp.eq.s32.totalorder %s20, 1
      %p139 = por %p137, %p138
      %p141 = scmp.ne.s32.totalorder %s126, %s140
      %p142 = scmp.eq.s32.totalorder %s20, 0
      %p143 = por %p141, %p142
      %s144 = ssub.s32 %s21, %s33
      %s145 = ssub.s32 %s22, %s29
      %s146 = sor.u32 %s144, %s145
      %p147 = scmp.eq.s32.totalorder %s146, 0
      %s149 = sadd.s32 %s148, 1
      %s150 = scalar_select %p147, %s148, %s149
      %p153 = pneg %p147
      %p154 = scmp.eq.s32.totalorder %s14, 1
      %p155 = por %p153, %p154
      %p156 = scmp.ne.s32.totalorder %s148, %s151
      %p157 = scmp.eq.s32.totalorder %s14, 0
      %p158 = por %p156, %p157
      %p159 = scmp.ne.s32.totalorder %s148, %s151
      %p160 = scmp.eq.s32.totalorder %s19, 1
      %p161 = por %p159, %p160
      %p162 = scmp.ne.s32.totalorder %s151, %s152
      %p163 = scmp.eq.s32.totalorder %s19, 0
      %p164 = por %p162, %p163
      %p165 = scmp.ne.s32.totalorder %s151, %s152
      %p166 = scmp.eq.s32.totalorder %s20, 1
      %p167 = por %p165, %p166
      %p169 = scmp.ne.s32.totalorder %s152, %s168
      %p170 = scmp.eq.s32.totalorder %s20, 0
      %p171 = por %p169, %p170
      %p172 = scmp.le.s32.totalorder 1, %s14
      %p173 = scmp.lt.s32.totalorder %s14, 3
      %p174 = pnand %p172, %p173
      %p175 = pneg %p174
      // Predicated region
      $region9: #{tpu_custom_call.1} parent=5 // pred_check
        _
      $region10: #{tpu_custom_call.1} parent=5 // pred_check_branch
        %177 = sbr.rel (%p174) target = $region12
      $region11: #{tpu_custom_call.1} parent=5 // pred_region
        %s178 = ssub.s32 %s14, 1
        // Predicated region
        $region13: #{tpu_custom_call.1} parent=11 // pred_check
          %p179 = pneg %p73
        $region14: #{tpu_custom_call.1} parent=11 // pred_check_branch
          %181 = sbr.rel (%p179) target = $region16
        $region15: #{tpu_custom_call.1} parent=11 // pred_region
          _
        $region16: #{tpu_custom_call.1} parent=11 // pred_fallthru
          _
        // Predicated region
        $region17: #{tpu_custom_call.1} parent=11 // pred_check
          %p182 = pneg %p94
        $region18: #{tpu_custom_call.1} parent=11 // pred_check_branch
          %184 = sbr.rel (%p182) target = $region20
        $region19: #{tpu_custom_call.1} parent=11 // pred_region
          _
        $region20: #{tpu_custom_call.1} parent=11 // pred_fallthru
          _
        // Predicated region
        $region21: #{tpu_custom_call.1} parent=11 // pred_check
          %p185 = pneg %p115
        $region22: #{tpu_custom_call.1} parent=11 // pred_check_branch
          %187 = sbr.rel (%p185) target = $region24
        $region23: #{tpu_custom_call.1} parent=11 // pred_region
          _
        $region24: #{tpu_custom_call.1} parent=11 // pred_fallthru
          _
        // Predicated region
        $region25: #{tpu_custom_call.1} parent=11 // pred_check
          %p188 = pneg %p136
        $region26: #{tpu_custom_call.1} parent=11 // pred_check_branch
          %190 = sbr.rel (%p188) target = $region28
        $region27: #{tpu_custom_call.1} parent=11 // pred_region
          _
        $region28: #{tpu_custom_call.1} parent=11 // pred_fallthru
          _
      $region12: #{tpu_custom_call.1} parent=5 // pred_fallthru
        _
      %p191 = scmp.lt.s32.totalorder %s14, 2
      // Predicated region
      $region29: #{tpu_custom_call.1} parent=5 // pred_check
        %p192 = pneg %p191
      $region30: #{tpu_custom_call.1} parent=5 // pred_check_branch
        %194 = sbr.rel (%p192) target = $region32
      $region31: #{tpu_custom_call.1} parent=5 // pred_region
        // Predicated region
        $region33: #{tpu_custom_call.1} parent=31 // pred_check
          %p195 = pneg %p46
        $region34: #{tpu_custom_call.1} parent=31 // pred_check_branch
          %197 = sbr.rel (%p195) target = $region36
        $region35: #{tpu_custom_call.1} parent=31 // pred_region
          %p198 = scmp.lt.s32.totalorder %s21, 1
          %s199 = scalar_select %p198, %s21, 1
          %s200 = smul.addr %s199, 54
          %s201 = smul.addr %s200, 8
          %s202 = scalar_lea.vmem %s0, %s201
        $region36: #{tpu_custom_call.1} parent=31 // pred_fallthru
          _
      $region32: #{tpu_custom_call.1} parent=5 // pred_fallthru
        _
      %p203 = scmp.le.s32.totalorder 1, %s14
      %p204 = scmp.lt.s32.totalorder %s14, 3
      %p205 = pnand %p203, %p204
      %p206 = pneg %p205
      // Predicated region
      $region37: #{tpu_custom_call.1} parent=5 // pred_check
        _
      $region38: #{tpu_custom_call.1} parent=5 // pred_check_branch
        %208 = sbr.rel (%p205) target = $region40
      $region39: #{tpu_custom_call.1} parent=5 // pred_region
        %s209 = ssub.s32 %s14, 1
        %p210 = scmp.lt.s32.totalorder %s23, 1
        %s211 = scalar_select %p210, %s23, 1
        %s212 = smul.addr %s211, 54
        %s213 = smul.addr %s212, 8
        %s214 = scalar_lea.vmem %s0, %s213
        %p215 = pneg %p52
        %p216 = pneg %p49
        %p217 = pneg %p73
        %p218 = pneg %p70
        %p219 = pneg %p94
        %p220 = pneg %p91
        %p221 = pneg %p115
        %p222 = pneg %p112
        %p223 = pneg %p136
        %p224 = pneg %p133
        %p225 = pneg %p164
        %p226 = pneg %p161
        %s227 = sand.u32 %s151, 1
        %s228 = scalar_lea.sflag [#allocation3], %s227
        %s229 = sand.u32 %s151, 1
        %s230 = smul.addr %s229, 256
        %s231 = scalar_lea.vmem [#allocation2], %s230
        %p232 = scmp.lt.s32.totalorder %s23, 1
        %s233 = scalar_select %p232, %s23, 1
        %s234 = smul.addr %s233, 54
        %s235 = smul.addr %s234, 8
        %s236 = scalar_lea.vmem %s0, %s235
        %s237 = smul.u32 %s24, 16
        %v238 = vld [vmem:[%s1] sm:$0xff]
        %v239 = vld [vmem:[%s1 + $0x8] sm:$0x1]
        %v240 = vld [vmem:[%s2] sm:$0x1]
        %s241 = smul.u32 %s237, 24
        %s242 = scalar_lea.vmem %s236, %s241
        %v243 = vld [vmem:[%s242] sm:$0xff]
        %v244 = vld [vmem:[%s242 + $0x8] sm:$0xff]
        %v245 = vld [vmem:[%s242 + $0x10] sm:$0x3]
        %v246 = vld [vmem:[%s242 + $0x18] sm:$0xff]
        %v247 = vld [vmem:[%s242 + $0x20] sm:$0xff]
        %v248 = vld [vmem:[%s242 + $0x28] sm:$0x3]
        %v249 = vld [vmem:[%s242 + $0x30] sm:$0xff]
        %v250 = vld [vmem:[%s242 + $0x38] sm:$0xff]
        %v251 = vld [vmem:[%s242 + $0x40] sm:$0x3]
        %v252 = vld [vmem:[%s242 + $0x48] sm:$0xff]
        %v253 = vld [vmem:[%s242 + $0x50] sm:$0xff]
        %v254 = vld [vmem:[%s242 + $0x58] sm:$0x3]
        %v255 = vld [vmem:[%s242 + $0x60] sm:$0xff]
        %v256 = vld [vmem:[%s242 + $0x68] sm:$0xff]
        %v257 = vld [vmem:[%s242 + $0x70] sm:$0x3]
        %v258 = vld [vmem:[%s242 + $0x78] sm:$0xff]
        %v259 = vld [vmem:[%s242 + $0x80] sm:$0xff]
        %v260 = vld [vmem:[%s242 + $0x88] sm:$0x3]
        %v261 = vld [vmem:[%s242 + $0x90] sm:$0xff]
        %v262 = vld [vmem:[%s242 + $0x98] sm:$0xff]
        %v263 = vld [vmem:[%s242 + $0xa0] sm:$0x3]
        %v264 = vld [vmem:[%s242 + $0xa8] sm:$0xff]
        %v265 = vld [vmem:[%s242 + $0xb0] sm:$0xff]
        %v266 = vld [vmem:[%s242 + $0xb8] sm:$0x3]
        %v267 = vld [vmem:[%s242 + $0xc0] sm:$0xff]
        %v268 = vld [vmem:[%s242 + $0xc8] sm:$0xff]
        %v269 = vld [vmem:[%s242 + $0xd0] sm:$0x3]
        %v270 = vld [vmem:[%s242 + $0xd8] sm:$0xff]
        %v271 = vld [vmem:[%s242 + $0xe0] sm:$0xff]
        %v272 = vld [vmem:[%s242 + $0xe8] sm:$0x3]
        %v273 = vld [vmem:[%s242 + $0xf0] sm:$0xff]
        %v274 = vld [vmem:[%s242 + $0xf8] sm:$0xff]
        %v275 = vld [vmem:[%s242 + $0x100] sm:$0x3]
        %v276 = vld [vmem:[%s242 + $0x108] sm:$0xff]
        %v277 = vld [vmem:[%s242 + $0x110] sm:$0xff]
        %v278 = vld [vmem:[%s242 + $0x118] sm:$0x3]
        %v279 = vld [vmem:[%s242 + $0x120] sm:$0xff]
        %v280 = vld [vmem:[%s242 + $0x128] sm:$0xff]
        %v281 = vld [vmem:[%s242 + $0x130] sm:$0x3]
        %v282 = vld [vmem:[%s242 + $0x138] sm:$0xff]
        %v283 = vld [vmem:[%s242 + $0x140] sm:$0xff]
        %v284 = vld [vmem:[%s242 + $0x148] sm:$0x3]
        %v285 = vld [vmem:[%s242 + $0x150] sm:$0xff]
        %v286 = vld [vmem:[%s242 + $0x158] sm:$0xff]
        %v287 = vld [vmem:[%s242 + $0x160] sm:$0x3]
        %v288 = vld [vmem:[%s242 + $0x168] sm:$0xff]
        %v289 = vld [vmem:[%s242 + $0x170] sm:$0xff]
        %v290 = vld [vmem:[%s242 + $0x178] sm:$0x3]
        %v291 = vld [vmem:[%s242 + $0x180] sm:$0xff]
        %v292 = vld [vmem:[%s242 + $0x188] sm:$0xff]
        %v293 = vld [vmem:[%s242 + $0x190] sm:$0x3]
        %v294 = vld [vmem:[%s242 + $0x198] sm:$0xff]
        %v295 = vld [vmem:[%s242 + $0x1a0] sm:$0xff]
        %v296 = vld [vmem:[%s242 + $0x1a8] sm:$0x3]
        %v297 = vperm.slane %v238, 0
        %v298 = vmul.f32 %v243, %v297
        %v299 = vmul.f32 %v244, %v297
        %v300 = vmul.f32 %v246, %v297
        %v301 = vmul.f32 %v247, %v297
        %v302 = vmul.f32 %v249, %v297
        %v303 = vmul.f32 %v250, %v297
        %v304 = vmul.f32 %v252, %v297
        %v305 = vmul.f32 %v253, %v297
        %v306 = vmul.f32 %v255, %v297
        %v307 = vmul.f32 %v256, %v297
        %v308 = vmul.f32 %v258, %v297
        %v309 = vmul.f32 %v259, %v297
        %v310 = vmul.f32 %v261, %v297
        %v311 = vmul.f32 %v262, %v297
        %v312 = vmul.f32 %v264, %v297
        %v313 = vmul.f32 %v265, %v297
        %v314 = vmul.f32 %v267, %v297
        %v315 = vmul.f32 %v268, %v297
        %v316 = vmul.f32 %v270, %v297
        %v317 = vmul.f32 %v271, %v297
        %v318 = vmul.f32 %v273, %v297
        %v319 = vmul.f32 %v274, %v297
        %v320 = vmul.f32 %v276, %v297
        %v321 = vmul.f32 %v277, %v297
        %v322 = vmul.f32 %v279, %v297
        %v323 = vmul.f32 %v280, %v297
        %v324 = vmul.f32 %v282, %v297
        %v325 = vmul.f32 %v283, %v297
        %v326 = vmul.f32 %v285, %v297
        %v327 = vmul.f32 %v286, %v297
        %v328 = vmul.f32 %v288, %v297
        %v329 = vmul.f32 %v289, %v297
        %v331 = vperm.slane %v240, 0
        %v333 = vadd.f32 %v298, %v331
        %v334 = vadd.f32 %v299, %v331
        %v335 = vadd.f32 %v300, %v331
        %v336 = vadd.f32 %v301, %v331
        %v337 = vadd.f32 %v302, %v331
        %v338 = vadd.f32 %v303, %v331
        %v339 = vadd.f32 %v304, %v331
        %v340 = vadd.f32 %v305, %v331
        %v341 = vadd.f32 %v306, %v331
        %v342 = vadd.f32 %v307, %v331
        %v343 = vadd.f32 %v308, %v331
        %v344 = vadd.f32 %v309, %v331
        %v345 = vadd.f32 %v310, %v331
        %v346 = vadd.f32 %v311, %v331
        %v347 = vadd.f32 %v312, %v331
        %v348 = vadd.f32 %v313, %v331
        %v349 = vadd.f32 %v314, %v331
        %v350 = vadd.f32 %v315, %v331
        %v351 = vadd.f32 %v316, %v331
        %v352 = vadd.f32 %v317, %v331
        %v353 = vadd.f32 %v318, %v331
        %v354 = vadd.f32 %v319, %v331
        %v355 = vadd.f32 %v320, %v331
        %v356 = vadd.f32 %v321, %v331
        %v357 = vadd.f32 %v322, %v331
        %v358 = vadd.f32 %v323, %v331
        %v359 = vadd.f32 %v324, %v331
        %v360 = vadd.f32 %v325, %v331
        %v361 = vadd.f32 %v326, %v331
        %v362 = vadd.f32 %v327, %v331
        %v363 = vadd.f32 %v328, %v331
        %v364 = vadd.f32 %v329, %v331
        %v365 = vperm.slane %v238, 1
        %v366 = vmul.f32 %v243, %v365
        %v367 = vmul.f32 %v244, %v365
        %v368 = vmul.f32 %v245, %v365
        %v369 = vmul.f32 %v246, %v365
        %v370 = vmul.f32 %v247, %v365
        %v371 = vmul.f32 %v248, %v365
        %v372 = vmul.f32 %v249, %v365
        %v373 = vmul.f32 %v250, %v365
        %v374 = vmul.f32 %v251, %v365
        %v375 = vmul.f32 %v252, %v365
        %v376 = vmul.f32 %v253, %v365
        %v377 = vmul.f32 %v254, %v365
        %v378 = vmul.f32 %v255, %v365
        %v379 = vmul.f32 %v256, %v365
        %v380 = vmul.f32 %v257, %v365
        %v381 = vmul.f32 %v258, %v365
        %v382 = vmul.f32 %v259, %v365
        %v383 = vmul.f32 %v260, %v365
        %v384 = vmul.f32 %v261, %v365
        %v385 = vmul.f32 %v262, %v365
        %v386 = vmul.f32 %v263, %v365
        %v387 = vmul.f32 %v264, %v365
        %v388 = vmul.f32 %v265, %v365
        %v389 = vmul.f32 %v266, %v365
        %v390 = vmul.f32 %v267, %v365
        %v391 = vmul.f32 %v268, %v365
        %v392 = vmul.f32 %v269, %v365
        %v393 = vmul.f32 %v270, %v365
        %v394 = vmul.f32 %v271, %v365
        %v395 = vmul.f32 %v272, %v365
        %v396 = vmul.f32 %v273, %v365
        %v397 = vmul.f32 %v274, %v365
        %v398 = vmul.f32 %v275, %v365
        %v399 = vmul.f32 %v276, %v365
        %v400 = vmul.f32 %v277, %v365
        %v401 = vmul.f32 %v278, %v365
        %v402 = vmul.f32 %v279, %v365
        %v403 = vmul.f32 %v280, %v365
        %v404 = vmul.f32 %v281, %v365
        %v405 = vmul.f32 %v282, %v365
        %v406 = vmul.f32 %v283, %v365
        %v407 = vmul.f32 %v284, %v365
        %v408 = vmul.f32 %v285, %v365
        %v409 = vmul.f32 %v286, %v365
        %v410 = vmul.f32 %v287, %v365
        %v411 = vmul.f32 %v288, %v365
        %v412 = vmul.f32 %v289, %v365
        %v413 = vmul.f32 %v290, %v365
        %vm462 = vcmask 1046528
        %v463 = vrot.slane %v366, 1
        %v464 = vrot.slane %v367, 1
        %v465 = vsel %vm462, %v463, %v464
        %v466 = vrot.slane %v368, 1
        %v467 = vsel %vm462, %v464, %v466
        %v468 = vrot.slane %v369, 1
        %v469 = vrot.slane %v370, 1
        %v470 = vsel %vm462, %v468, %v469
        %v471 = vrot.slane %v371, 1
        %v472 = vsel %vm462, %v469, %v471
        %v473 = vrot.slane %v372, 1
        %v474 = vrot.slane %v373, 1
        %v475 = vsel %vm462, %v473, %v474
        %v476 = vrot.slane %v374, 1
        %v477 = vsel %vm462, %v474, %v476
        %v478 = vrot.slane %v375, 1
        %v479 = vrot.slane %v376, 1
        %v480 = vsel %vm462, %v478, %v479
        %v481 = vrot.slane %v377, 1
        %v482 = vsel %vm462, %v479, %v481
        %v483 = vrot.slane %v378, 1
        %v484 = vrot.slane %v379, 1
        %v485 = vsel %vm462, %v483, %v484
        %v486 = vrot.slane %v380, 1
        %v487 = vsel %vm462, %v484, %v486
        %v488 = vrot.slane %v381, 1
        %v489 = vrot.slane %v382, 1
        %v490 = vsel %vm462, %v488, %v489
        %v491 = vrot.slane %v383, 1
        %v492 = vsel %vm462, %v489, %v491
        %v493 = vrot.slane %v384, 1
        %v494 = vrot.slane %v385, 1
        %v495 = vsel %vm462, %v493, %v494
        %v496 = vrot.slane %v386, 1
        %v497 = vsel %vm462, %v494, %v496
        %v498 = vrot.slane %v387, 1
        %v499 = vrot.slane %v388, 1
        %v500 = vsel %vm462, %v498, %v499
        %v501 = vrot.slane %v389, 1
        %v502 = vsel %vm462, %v499, %v501
        %v503 = vrot.slane %v390, 1
        %v504 = vrot.slane %v391, 1
        %v505 = vsel %vm462, %v503, %v504
        %v506 = vrot.slane %v392, 1
        %v507 = vsel %vm462, %v504, %v506
        %v508 = vrot.slane %v393, 1
        %v509 = vrot.slane %v394, 1
        %v510 = vsel %vm462, %v508, %v509
        %v511 = vrot.slane %v395, 1
        %v512 = vsel %vm462, %v509, %v511
        %v513 = vrot.slane %v396, 1
        %v514 = vrot.slane %v397, 1
        %v515 = vsel %vm462, %v513, %v514
        %v516 = vrot.slane %v398, 1
        %v517 = vsel %vm462, %v514, %v516
        %v518 = vrot.slane %v399, 1
        %v519 = vrot.slane %v400, 1
        %v520 = vsel %vm462, %v518, %v519
        %v521 = vrot.slane %v401, 1
        %v522 = vsel %vm462, %v519, %v521
        %v523 = vrot.slane %v402, 1
        %v524 = vrot.slane %v403, 1
        %v525 = vsel %vm462, %v523, %v524
        %v526 = vrot.slane %v404, 1
        %v527 = vsel %vm462, %v524, %v526
        %v528 = vrot.slane %v405, 1
        %v529 = vrot.slane %v406, 1
        %v530 = vsel %vm462, %v528, %v529
        %v531 = vrot.slane %v407, 1
        %v532 = vsel %vm462, %v529, %v531
        %v533 = vrot.slane %v408, 1
        %v534 = vrot.slane %v409, 1
        %v535 = vsel %vm462, %v533, %v534
        %v536 = vrot.slane %v410, 1
        %v537 = vsel %vm462, %v534, %v536
        %v538 = vrot.slane %v411, 1
        %v539 = vrot.slane %v412, 1
        %v540 = vsel %vm462, %v538, %v539
        %v541 = vrot.slane %v413, 1
        %v542 = vsel %vm462, %v539, %v541
        %v575 = vadd.f32 %v333, %v465
        %v576 = vadd.f32 %v334, %v467
        %v577 = vadd.f32 %v335, %v470
        %v578 = vadd.f32 %v336, %v472
        %v579 = vadd.f32 %v337, %v475
        %v580 = vadd.f32 %v338, %v477
        %v581 = vadd.f32 %v339, %v480
        %v582 = vadd.f32 %v340, %v482
        %v583 = vadd.f32 %v341, %v485
        %v584 = vadd.f32 %v342, %v487
        %v585 = vadd.f32 %v343, %v490
        %v586 = vadd.f32 %v344, %v492
        %v587 = vadd.f32 %v345, %v495
        %v588 = vadd.f32 %v346, %v497
        %v589 = vadd.f32 %v347, %v500
        %v590 = vadd.f32 %v348, %v502
        %v591 = vadd.f32 %v349, %v505
        %v592 = vadd.f32 %v350, %v507
        %v593 = vadd.f32 %v351, %v510
        %v594 = vadd.f32 %v352, %v512
        %v595 = vadd.f32 %v353, %v515
        %v596 = vadd.f32 %v354, %v517
        %v597 = vadd.f32 %v355, %v520
        %v598 = vadd.f32 %v356, %v522
        %v599 = vadd.f32 %v357, %v525
        %v600 = vadd.f32 %v358, %v527
        %v601 = vadd.f32 %v359, %v530
        %v602 = vadd.f32 %v360, %v532
        %v603 = vadd.f32 %v361, %v535
        %v604 = vadd.f32 %v362, %v537
        %v605 = vadd.f32 %v363, %v540
        %v606 = vadd.f32 %v364, %v542
        %v607 = vperm.slane %v238, 2
        %v608 = vmul.f32 %v243, %v607
        %v609 = vmul.f32 %v244, %v607
        %v610 = vmul.f32 %v245, %v607
        %v611 = vmul.f32 %v246, %v607
        %v612 = vmul.f32 %v247, %v607
        %v613 = vmul.f32 %v248, %v607
        %v614 = vmul.f32 %v249, %v607
        %v615 = vmul.f32 %v250, %v607
        %v616 = vmul.f32 %v251, %v607
        %v617 = vmul.f32 %v252, %v607
        %v618 = vmul.f32 %v253, %v607
        %v619 = vmul.f32 %v254, %v607
        %v620 = vmul.f32 %v255, %v607
        %v621 = vmul.f32 %v256, %v607
        %v622 = vmul.f32 %v257, %v607
        %v623 = vmul.f32 %v258, %v607
        %v624 = vmul.f32 %v259, %v607
        %v625 = vmul.f32 %v260, %v607
        %v626 = vmul.f32 %v261, %v607
        %v627 = vmul.f32 %v262, %v607
        %v628 = vmul.f32 %v263, %v607
        %v629 = vmul.f32 %v264, %v607
        %v630 = vmul.f32 %v265, %v607
        %v631 = vmul.f32 %v266, %v607
        %v632 = vmul.f32 %v267, %v607
        %v633 = vmul.f32 %v268, %v607
        %v634 = vmul.f32 %v269, %v607
        %v635 = vmul.f32 %v270, %v607
        %v636 = vmul.f32 %v271, %v607
        %v637 = vmul.f32 %v272, %v607
        %v638 = vmul.f32 %v273, %v607
        %v639 = vmul.f32 %v274, %v607
        %v640 = vmul.f32 %v275, %v607
        %v641 = vmul.f32 %v276, %v607
        %v642 = vmul.f32 %v277, %v607
        %v643 = vmul.f32 %v278, %v607
        %v644 = vmul.f32 %v279, %v607
        %v645 = vmul.f32 %v280, %v607
        %v646 = vmul.f32 %v281, %v607
        %v647 = vmul.f32 %v282, %v607
        %v648 = vmul.f32 %v283, %v607
        %v649 = vmul.f32 %v284, %v607
        %v650 = vmul.f32 %v285, %v607
        %v651 = vmul.f32 %v286, %v607
        %v652 = vmul.f32 %v287, %v607
        %v653 = vmul.f32 %v288, %v607
        %v654 = vmul.f32 %v289, %v607
        %v655 = vmul.f32 %v290, %v607
        %vm704 = vcmask 1045504
        %v705 = vrot.slane %v608, 2
        %v706 = vrot.slane %v609, 2
        %v707 = vsel %vm704, %v705, %v706
        %v708 = vrot.slane %v610, 2
        %v709 = vsel %vm704, %v706, %v708
        %v710 = vrot.slane %v611, 2
        %v711 = vrot.slane %v612, 2
        %v712 = vsel %vm704, %v710, %v711
        %v713 = vrot.slane %v613, 2
        %v714 = vsel %vm704, %v711, %v713
        %v715 = vrot.slane %v614, 2
        %v716 = vrot.slane %v615, 2
        %v717 = vsel %vm704, %v715, %v716
        %v718 = vrot.slane %v616, 2
        %v719 = vsel %vm704, %v716, %v718
        %v720 = vrot.slane %v617, 2
        %v721 = vrot.slane %v618, 2
        %v722 = vsel %vm704, %v720, %v721
        %v723 = vrot.slane %v619, 2
        %v724 = vsel %vm704, %v721, %v723
        %v725 = vrot.slane %v620, 2
        %v726 = vrot.slane %v621, 2
        %v727 = vsel %vm704, %v725, %v726
        %v728 = vrot.slane %v622, 2
        %v729 = vsel %vm704, %v726, %v728
        %v730 = vrot.slane %v623, 2
        %v731 = vrot.slane %v624, 2
        %v732 = vsel %vm704, %v730, %v731
        %v733 = vrot.slane %v625, 2
        %v734 = vsel %vm704, %v731, %v733
        %v735 = vrot.slane %v626, 2
        %v736 = vrot.slane %v627, 2
        %v737 = vsel %vm704, %v735, %v736
        %v738 = vrot.slane %v628, 2
        %v739 = vsel %vm704, %v736, %v738
        %v740 = vrot.slane %v629, 2
        %v741 = vrot.slane %v630, 2
        %v742 = vsel %vm704, %v740, %v741
        %v743 = vrot.slane %v631, 2
        %v744 = vsel %vm704, %v741, %v743
        %v745 = vrot.slane %v632, 2
        %v746 = vrot.slane %v633, 2
        %v747 = vsel %vm704, %v745, %v746
        %v748 = vrot.slane %v634, 2
        %v749 = vsel %vm704, %v746, %v748
        %v750 = vrot.slane %v635, 2
        %v751 = vrot.slane %v636, 2
        %v752 = vsel %vm704, %v750, %v751
        %v753 = vrot.slane %v637, 2
        %v754 = vsel %vm704, %v751, %v753
        %v755 = vrot.slane %v638, 2
        %v756 = vrot.slane %v639, 2
        %v757 = vsel %vm704, %v755, %v756
        %v758 = vrot.slane %v640, 2
        %v759 = vsel %vm704, %v756, %v758
        %v760 = vrot.slane %v641, 2
        %v761 = vrot.slane %v642, 2
        %v762 = vsel %vm704, %v760, %v761
        %v763 = vrot.slane %v643, 2
        %v764 = vsel %vm704, %v761, %v763
        %v765 = vrot.slane %v644, 2
        %v766 = vrot.slane %v645, 2
        %v767 = vsel %vm704, %v765, %v766
        %v768 = vrot.slane %v646, 2
        %v769 = vsel %vm704, %v766, %v768
        %v770 = vrot.slane %v647, 2
        %v771 = vrot.slane %v648, 2
        %v772 = vsel %vm704, %v770, %v771
        %v773 = vrot.slane %v649, 2
        %v774 = vsel %vm704, %v771, %v773
        %v775 = vrot.slane %v650, 2
        %v776 = vrot.slane %v651, 2
        %v777 = vsel %vm704, %v775, %v776
        %v778 = vrot.slane %v652, 2
        %v779 = vsel %vm704, %v776, %v778
        %v780 = vrot.slane %v653, 2
        %v781 = vrot.slane %v654, 2
        %v782 = vsel %vm704, %v780, %v781
        %v783 = vrot.slane %v655, 2
        %v784 = vsel %vm704, %v781, %v783
        %v817 = vadd.f32 %v575, %v707
        %v818 = vadd.f32 %v576, %v709
        %v819 = vadd.f32 %v577, %v712
        %v820 = vadd.f32 %v578, %v714
        %v821 = vadd.f32 %v579, %v717
        %v822 = vadd.f32 %v580, %v719
        %v823 = vadd.f32 %v581, %v722
        %v824 = vadd.f32 %v582, %v724
        %v825 = vadd.f32 %v583, %v727
        %v826 = vadd.f32 %v584, %v729
        %v827 = vadd.f32 %v585, %v732
        %v828 = vadd.f32 %v586, %v734
        %v829 = vadd.f32 %v587, %v737
        %v830 = vadd.f32 %v588, %v739
        %v831 = vadd.f32 %v589, %v742
        %v832 = vadd.f32 %v590, %v744
        %v833 = vadd.f32 %v591, %v747
        %v834 = vadd.f32 %v592, %v749
        %v835 = vadd.f32 %v593, %v752
        %v836 = vadd.f32 %v594, %v754
        %v837 = vadd.f32 %v595, %v757
        %v838 = vadd.f32 %v596, %v759
        %v839 = vadd.f32 %v597, %v762
        %v840 = vadd.f32 %v598, %v764
        %v841 = vadd.f32 %v599, %v767
        %v842 = vadd.f32 %v600, %v769
        %v843 = vadd.f32 %v601, %v772
        %v844 = vadd.f32 %v602, %v774
        %v845 = vadd.f32 %v603, %v777
        %v846 = vadd.f32 %v604, %v779
        %v847 = vadd.f32 %v605, %v782
        %v848 = vadd.f32 %v606, %v784
        %v849 = vperm.slane %v238, 3
        %v850 = vmul.f32 %v246, %v849
        %v851 = vmul.f32 %v247, %v849
        %v852 = vmul.f32 %v249, %v849
        %v853 = vmul.f32 %v250, %v849
        %v854 = vmul.f32 %v252, %v849
        %v855 = vmul.f32 %v253, %v849
        %v856 = vmul.f32 %v255, %v849
        %v857 = vmul.f32 %v256, %v849
        %v858 = vmul.f32 %v258, %v849
        %v859 = vmul.f32 %v259, %v849
        %v860 = vmul.f32 %v261, %v849
        %v861 = vmul.f32 %v262, %v849
        %v862 = vmul.f32 %v264, %v849
        %v863 = vmul.f32 %v265, %v849
        %v864 = vmul.f32 %v267, %v849
        %v865 = vmul.f32 %v268, %v849
        %v866 = vmul.f32 %v270, %v849
        %v867 = vmul.f32 %v271, %v849
        %v868 = vmul.f32 %v273, %v849
        %v869 = vmul.f32 %v274, %v849
        %v870 = vmul.f32 %v276, %v849
        %v871 = vmul.f32 %v277, %v849
        %v872 = vmul.f32 %v279, %v849
        %v873 = vmul.f32 %v280, %v849
        %v874 = vmul.f32 %v282, %v849
        %v875 = vmul.f32 %v283, %v849
        %v876 = vmul.f32 %v285, %v849
        %v877 = vmul.f32 %v286, %v849
        %v878 = vmul.f32 %v288, %v849
        %v879 = vmul.f32 %v289, %v849
        %v880 = vmul.f32 %v291, %v849
        %v881 = vmul.f32 %v292, %v849
        %v882 = vadd.f32 %v817, %v850
        %v883 = vadd.f32 %v818, %v851
        %v884 = vadd.f32 %v819, %v852
        %v885 = vadd.f32 %v820, %v853
        %v886 = vadd.f32 %v821, %v854
        %v887 = vadd.f32 %v822, %v855
        %v888 = vadd.f32 %v823, %v856
        %v889 = vadd.f32 %v824, %v857
        %v890 = vadd.f32 %v825, %v858
        %v891 = vadd.f32 %v826, %v859
        %v892 = vadd.f32 %v827, %v860
        %v893 = vadd.f32 %v828, %v861
        %v894 = vadd.f32 %v829, %v862
        %v895 = vadd.f32 %v830, %v863
        %v896 = vadd.f32 %v831, %v864
        %v897 = vadd.f32 %v832, %v865
        %v898 = vadd.f32 %v833, %v866
        %v899 = vadd.f32 %v834, %v867
        %v900 = vadd.f32 %v835, %v868
        %v901 = vadd.f32 %v836, %v869
        %v902 = vadd.f32 %v837, %v870
        %v903 = vadd.f32 %v838, %v871
        %v904 = vadd.f32 %v839, %v872
        %v905 = vadd.f32 %v840, %v873
        %v906 = vadd.f32 %v841, %v874
        %v907 = vadd.f32 %v842, %v875
        %v908 = vadd.f32 %v843, %v876
        %v909 = vadd.f32 %v844, %v877
        %v910 = vadd.f32 %v845, %v878
        %v911 = vadd.f32 %v846, %v879
        %v912 = vadd.f32 %v847, %v880
        %v913 = vadd.f32 %v848, %v881
        %v914 = vperm.slane %v238, 4
        %v915 = vmul.f32 %v246, %v914
        %v916 = vmul.f32 %v247, %v914
        %v917 = vmul.f32 %v248, %v914
        %v918 = vmul.f32 %v249, %v914
        %v919 = vmul.f32 %v250, %v914
        %v920 = vmul.f32 %v251, %v914
        %v921 = vmul.f32 %v252, %v914
        %v922 = vmul.f32 %v253, %v914
        %v923 = vmul.f32 %v254, %v914
        %v924 = vmul.f32 %v255, %v914
        %v925 = vmul.f32 %v256, %v914
        %v926 = vmul.f32 %v257, %v914
        %v927 = vmul.f32 %v258, %v914
        %v928 = vmul.f32 %v259, %v914
        %v929 = vmul.f32 %v260, %v914
        %v930 = vmul.f32 %v261, %v914
        %v931 = vmul.f32 %v262, %v914
        %v932 = vmul.f32 %v263, %v914
        %v933 = vmul.f32 %v264, %v914
        %v934 = vmul.f32 %v265, %v914
        %v935 = vmul.f32 %v266, %v914
        %v936 = vmul.f32 %v267, %v914
        %v937 = vmul.f32 %v268, %v914
        %v938 = vmul.f32 %v269, %v914
        %v939 = vmul.f32 %v270, %v914
        %v940 = vmul.f32 %v271, %v914
        %v941 = vmul.f32 %v272, %v914
        %v942 = vmul.f32 %v273, %v914
        %v943 = vmul.f32 %v274, %v914
        %v944 = vmul.f32 %v275, %v914
        %v945 = vmul.f32 %v276, %v914
        %v946 = vmul.f32 %v277, %v914
        %v947 = vmul.f32 %v278, %v914
        %v948 = vmul.f32 %v279, %v914
        %v949 = vmul.f32 %v280, %v914
        %v950 = vmul.f32 %v281, %v914
        %v951 = vmul.f32 %v282, %v914
        %v952 = vmul.f32 %v283, %v914
        %v953 = vmul.f32 %v284, %v914
        %v954 = vmul.f32 %v285, %v914
        %v955 = vmul.f32 %v286, %v914
        %v956 = vmul.f32 %v287, %v914
        %v957 = vmul.f32 %v288, %v914
        %v958 = vmul.f32 %v289, %v914
        %v959 = vmul.f32 %v290, %v914
        %v960 = vmul.f32 %v291, %v914
        %v961 = vmul.f32 %v292, %v914
        %v962 = vmul.f32 %v293, %v914
        %v1011 = vrot.slane %v915, 1
        %v1012 = vrot.slane %v916, 1
        %v1013 = vsel %vm462, %v1011, %v1012
        %v1014 = vrot.slane %v917, 1
        %v1015 = vsel %vm462, %v1012, %v1014
        %v1016 = vrot.slane %v918, 1
        %v1017 = vrot.slane %v919, 1
        %v1018 = vsel %vm462, %v1016, %v1017
        %v1019 = vrot.slane %v920, 1
        %v1020 = vsel %vm462, %v1017, %v1019
        %v1021 = vrot.slane %v921, 1
        %v1022 = vrot.slane %v922, 1
        %v1023 = vsel %vm462, %v1021, %v1022
        %v1024 = vrot.slane %v923, 1
        %v1025 = vsel %vm462, %v1022, %v1024
        %v1026 = vrot.slane %v924, 1
        %v1027 = vrot.slane %v925, 1
        %v1028 = vsel %vm462, %v1026, %v1027
        %v1029 = vrot.slane %v926, 1
        %v1030 = vsel %vm462, %v1027, %v1029
        %v1031 = vrot.slane %v927, 1
        %v1032 = vrot.slane %v928, 1
        %v1033 = vsel %vm462, %v1031, %v1032
        %v1034 = vrot.slane %v929, 1
        %v1035 = vsel %vm462, %v1032, %v1034
        %v1036 = vrot.slane %v930, 1
        %v1037 = vrot.slane %v931, 1
        %v1038 = vsel %vm462, %v1036, %v1037
        %v1039 = vrot.slane %v932, 1
        %v1040 = vsel %vm462, %v1037, %v1039
        %v1041 = vrot.slane %v933, 1
        %v1042 = vrot.slane %v934, 1
        %v1043 = vsel %vm462, %v1041, %v1042
        %v1044 = vrot.slane %v935, 1
        %v1045 = vsel %vm462, %v1042, %v1044
        %v1046 = vrot.slane %v936, 1
        %v1047 = vrot.slane %v937, 1
        %v1048 = vsel %vm462, %v1046, %v1047
        %v1049 = vrot.slane %v938, 1
        %v1050 = vsel %vm462, %v1047, %v1049
        %v1051 = vrot.slane %v939, 1
        %v1052 = vrot.slane %v940, 1
        %v1053 = vsel %vm462, %v1051, %v1052
        %v1054 = vrot.slane %v941, 1
        %v1055 = vsel %vm462, %v1052, %v1054
        %v1056 = vrot.slane %v942, 1
        %v1057 = vrot.slane %v943, 1
        %v1058 = vsel %vm462, %v1056, %v1057
        %v1059 = vrot.slane %v944, 1
        %v1060 = vsel %vm462, %v1057, %v1059
        %v1061 = vrot.slane %v945, 1
        %v1062 = vrot.slane %v946, 1
        %v1063 = vsel %vm462, %v1061, %v1062
        %v1064 = vrot.slane %v947, 1
        %v1065 = vsel %vm462, %v1062, %v1064
        %v1066 = vrot.slane %v948, 1
        %v1067 = vrot.slane %v949, 1
        %v1068 = vsel %vm462, %v1066, %v1067
        %v1069 = vrot.slane %v950, 1
        %v1070 = vsel %vm462, %v1067, %v1069
        %v1071 = vrot.slane %v951, 1
        %v1072 = vrot.slane %v952, 1
        %v1073 = vsel %vm462, %v1071, %v1072
        %v1074 = vrot.slane %v953, 1
        %v1075 = vsel %vm462, %v1072, %v1074
        %v1076 = vrot.slane %v954, 1
        %v1077 = vrot.slane %v955, 1
        %v1078 = vsel %vm462, %v1076, %v1077
        %v1079 = vrot.slane %v956, 1
        %v1080 = vsel %vm462, %v1077, %v1079
        %v1081 = vrot.slane %v957, 1
        %v1082 = vrot.slane %v958, 1
        %v1083 = vsel %vm462, %v1081, %v1082
        %v1084 = vrot.slane %v959, 1
        %v1085 = vsel %vm462, %v1082, %v1084
        %v1086 = vrot.slane %v960, 1
        %v1087 = vrot.slane %v961, 1
        %v1088 = vsel %vm462, %v1086, %v1087
        %v1089 = vrot.slane %v962, 1
        %v1090 = vsel %vm462, %v1087, %v1089
        %v1123 = vadd.f32 %v882, %v1013
        %v1124 = vadd.f32 %v883, %v1015
        %v1125 = vadd.f32 %v884, %v1018
        %v1126 = vadd.f32 %v885, %v1020
        %v1127 = vadd.f32 %v886, %v1023
        %v1128 = vadd.f32 %v887, %v1025
        %v1129 = vadd.f32 %v888, %v1028
        %v1130 = vadd.f32 %v889, %v1030
        %v1131 = vadd.f32 %v890, %v1033
        %v1132 = vadd.f32 %v891, %v1035
        %v1133 = vadd.f32 %v892, %v1038
        %v1134 = vadd.f32 %v893, %v1040
        %v1135 = vadd.f32 %v894, %v1043
        %v1136 = vadd.f32 %v895, %v1045
        %v1137 = vadd.f32 %v896, %v1048
        %v1138 = vadd.f32 %v897, %v1050
        %v1139 = vadd.f32 %v898, %v1053
        %v1140 = vadd.f32 %v899, %v1055
        %v1141 = vadd.f32 %v900, %v1058
        %v1142 = vadd.f32 %v901, %v1060
        %v1143 = vadd.f32 %v902, %v1063
        %v1144 = vadd.f32 %v903, %v1065
        %v1145 = vadd.f32 %v904, %v1068
        %v1146 = vadd.f32 %v905, %v1070
        %v1147 = vadd.f32 %v906, %v1073
        %v1148 = vadd.f32 %v907, %v1075
        %v1149 = vadd.f32 %v908, %v1078
        %v1150 = vadd.f32 %v909, %v1080
        %v1151 = vadd.f32 %v910, %v1083
        %v1152 = vadd.f32 %v911, %v1085
        %v1153 = vadd.f32 %v912, %v1088
        %v1154 = vadd.f32 %v913, %v1090
        %v1155 = vperm.slane %v238, 5
        %v1156 = vmul.f32 %v246, %v1155
        %v1157 = vmul.f32 %v247, %v1155
        %v1158 = vmul.f32 %v248, %v1155
        %v1159 = vmul.f32 %v249, %v1155
        %v1160 = vmul.f32 %v250, %v1155
        %v1161 = vmul.f32 %v251, %v1155
        %v1162 = vmul.f32 %v252, %v1155
        %v1163 = vmul.f32 %v253, %v1155
        %v1164 = vmul.f32 %v254, %v1155
        %v1165 = vmul.f32 %v255, %v1155
        %v1166 = vmul.f32 %v256, %v1155
        %v1167 = vmul.f32 %v257, %v1155
        %v1168 = vmul.f32 %v258, %v1155
        %v1169 = vmul.f32 %v259, %v1155
        %v1170 = vmul.f32 %v260, %v1155
        %v1171 = vmul.f32 %v261, %v1155
        %v1172 = vmul.f32 %v262, %v1155
        %v1173 = vmul.f32 %v263, %v1155
        %v1174 = vmul.f32 %v264, %v1155
        %v1175 = vmul.f32 %v265, %v1155
        %v1176 = vmul.f32 %v266, %v1155
        %v1177 = vmul.f32 %v267, %v1155
        %v1178 = vmul.f32 %v268, %v1155
        %v1179 = vmul.f32 %v269, %v1155
        %v1180 = vmul.f32 %v270, %v1155
        %v1181 = vmul.f32 %v271, %v1155
        %v1182 = vmul.f32 %v272, %v1155
        %v1183 = vmul.f32 %v273, %v1155
        %v1184 = vmul.f32 %v274, %v1155
        %v1185 = vmul.f32 %v275, %v1155
        %v1186 = vmul.f32 %v276, %v1155
        %v1187 = vmul.f32 %v277, %v1155
        %v1188 = vmul.f32 %v278, %v1155
        %v1189 = vmul.f32 %v279, %v1155
        %v1190 = vmul.f32 %v280, %v1155
        %v1191 = vmul.f32 %v281, %v1155
        %v1192 = vmul.f32 %v282, %v1155
        %v1193 = vmul.f32 %v283, %v1155
        %v1194 = vmul.f32 %v284, %v1155
        %v1195 = vmul.f32 %v285, %v1155
        %v1196 = vmul.f32 %v286, %v1155
        %v1197 = vmul.f32 %v287, %v1155
        %v1198 = vmul.f32 %v288, %v1155
        %v1199 = vmul.f32 %v289, %v1155
        %v1200 = vmul.f32 %v290, %v1155
        %v1201 = vmul.f32 %v291, %v1155
        %v1202 = vmul.f32 %v292, %v1155
        %v1203 = vmul.f32 %v293, %v1155
        %v1252 = vrot.slane %v1156, 2
        %v1253 = vrot.slane %v1157, 2
        %v1254 = vsel %vm704, %v1252, %v1253
        %v1255 = vrot.slane %v1158, 2
        %v1256 = vsel %vm704, %v1253, %v1255
        %v1257 = vrot.slane %v1159, 2
        %v1258 = vrot.slane %v1160, 2
        %v1259 = vsel %vm704, %v1257, %v1258
        %v1260 = vrot.slane %v1161, 2
        %v1261 = vsel %vm704, %v1258, %v1260
        %v1262 = vrot.slane %v1162, 2
        %v1263 = vrot.slane %v1163, 2
        %v1264 = vsel %vm704, %v1262, %v1263
        %v1265 = vrot.slane %v1164, 2
        %v1266 = vsel %vm704, %v1263, %v1265
        %v1267 = vrot.slane %v1165, 2
        %v1268 = vrot.slane %v1166, 2
        %v1269 = vsel %vm704, %v1267, %v1268
        %v1270 = vrot.slane %v1167, 2
        %v1271 = vsel %vm704, %v1268, %v1270
        %v1272 = vrot.slane %v1168, 2
        %v1273 = vrot.slane %v1169, 2
        %v1274 = vsel %vm704, %v1272, %v1273
        %v1275 = vrot.slane %v1170, 2
        %v1276 = vsel %vm704, %v1273, %v1275
        %v1277 = vrot.slane %v1171, 2
        %v1278 = vrot.slane %v1172, 2
        %v1279 = vsel %vm704, %v1277, %v1278
        %v1280 = vrot.slane %v1173, 2
        %v1281 = vsel %vm704, %v1278, %v1280
        %v1282 = vrot.slane %v1174, 2
        %v1283 = vrot.slane %v1175, 2
        %v1284 = vsel %vm704, %v1282, %v1283
        %v1285 = vrot.slane %v1176, 2
        %v1286 = vsel %vm704, %v1283, %v1285
        %v1287 = vrot.slane %v1177, 2
        %v1288 = vrot.slane %v1178, 2
        %v1289 = vsel %vm704, %v1287, %v1288
        %v1290 = vrot.slane %v1179, 2
        %v1291 = vsel %vm704, %v1288, %v1290
        %v1292 = vrot.slane %v1180, 2
        %v1293 = vrot.slane %v1181, 2
        %v1294 = vsel %vm704, %v1292, %v1293
        %v1295 = vrot.slane %v1182, 2
        %v1296 = vsel %vm704, %v1293, %v1295
        %v1297 = vrot.slane %v1183, 2
        %v1298 = vrot.slane %v1184, 2
        %v1299 = vsel %vm704, %v1297, %v1298
        %v1300 = vrot.slane %v1185, 2
        %v1301 = vsel %vm704, %v1298, %v1300
        %v1302 = vrot.slane %v1186, 2
        %v1303 = vrot.slane %v1187, 2
        %v1304 = vsel %vm704, %v1302, %v1303
        %v1305 = vrot.slane %v1188, 2
        %v1306 = vsel %vm704, %v1303, %v1305
        %v1307 = vrot.slane %v1189, 2
        %v1308 = vrot.slane %v1190, 2
        %v1309 = vsel %vm704, %v1307, %v1308
        %v1310 = vrot.slane %v1191, 2
        %v1311 = vsel %vm704, %v1308, %v1310
        %v1312 = vrot.slane %v1192, 2
        %v1313 = vrot.slane %v1193, 2
        %v1314 = vsel %vm704, %v1312, %v1313
        %v1315 = vrot.slane %v1194, 2
        %v1316 = vsel %vm704, %v1313, %v1315
        %v1317 = vrot.slane %v1195, 2
        %v1318 = vrot.slane %v1196, 2
        %v1319 = vsel %vm704, %v1317, %v1318
        %v1320 = vrot.slane %v1197, 2
        %v1321 = vsel %vm704, %v1318, %v1320
        %v1322 = vrot.slane %v1198, 2
        %v1323 = vrot.slane %v1199, 2
        %v1324 = vsel %vm704, %v1322, %v1323
        %v1325 = vrot.slane %v1200, 2
        %v1326 = vsel %vm704, %v1323, %v1325
        %v1327 = vrot.slane %v1201, 2
        %v1328 = vrot.slane %v1202, 2
        %v1329 = vsel %vm704, %v1327, %v1328
        %v1330 = vrot.slane %v1203, 2
        %v1331 = vsel %vm704, %v1328, %v1330
        %v1364 = vadd.f32 %v1123, %v1254
        %v1365 = vadd.f32 %v1124, %v1256
        %v1366 = vadd.f32 %v1125, %v1259
        %v1367 = vadd.f32 %v1126, %v1261
        %v1368 = vadd.f32 %v1127, %v1264
        %v1369 = vadd.f32 %v1128, %v1266
        %v1370 = vadd.f32 %v1129, %v1269
        %v1371 = vadd.f32 %v1130, %v1271
        %v1372 = vadd.f32 %v1131, %v1274
        %v1373 = vadd.f32 %v1132, %v1276
        %v1374 = vadd.f32 %v1133, %v1279
        %v1375 = vadd.f32 %v1134, %v1281
        %v1376 = vadd.f32 %v1135, %v1284
        %v1377 = vadd.f32 %v1136, %v1286
        %v1378 = vadd.f32 %v1137, %v1289
        %v1379 = vadd.f32 %v1138, %v1291
        %v1380 = vadd.f32 %v1139, %v1294
        %v1381 = vadd.f32 %v1140, %v1296
        %v1382 = vadd.f32 %v1141, %v1299
        %v1383 = vadd.f32 %v1142, %v1301
        %v1384 = vadd.f32 %v1143, %v1304
        %v1385 = vadd.f32 %v1144, %v1306
        %v1386 = vadd.f32 %v1145, %v1309
        %v1387 = vadd.f32 %v1146, %v1311
        %v1388 = vadd.f32 %v1147, %v1314
        %v1389 = vadd.f32 %v1148, %v1316
        %v1390 = vadd.f32 %v1149, %v1319
        %v1391 = vadd.f32 %v1150, %v1321
        %v1392 = vadd.f32 %v1151, %v1324
        %v1393 = vadd.f32 %v1152, %v1326
        %v1394 = vadd.f32 %v1153, %v1329
        %v1395 = vadd.f32 %v1154, %v1331
        %v1396 = vperm.slane %v238, 6
        %v1397 = vmul.f32 %v249, %v1396
        %v1398 = vmul.f32 %v250, %v1396
        %v1399 = vmul.f32 %v252, %v1396
        %v1400 = vmul.f32 %v253, %v1396
        %v1401 = vmul.f32 %v255, %v1396
        %v1402 = vmul.f32 %v256, %v1396
        %v1403 = vmul.f32 %v258, %v1396
        %v1404 = vmul.f32 %v259, %v1396
        %v1405 = vmul.f32 %v261, %v1396
        %v1406 = vmul.f32 %v262, %v1396
        %v1407 = vmul.f32 %v264, %v1396
        %v1408 = vmul.f32 %v265, %v1396
        %v1409 = vmul.f32 %v267, %v1396
        %v1410 = vmul.f32 %v268, %v1396
        %v1411 = vmul.f32 %v270, %v1396
        %v1412 = vmul.f32 %v271, %v1396
        %v1413 = vmul.f32 %v273, %v1396
        %v1414 = vmul.f32 %v274, %v1396
        %v1415 = vmul.f32 %v276, %v1396
        %v1416 = vmul.f32 %v277, %v1396
        %v1417 = vmul.f32 %v279, %v1396
        %v1418 = vmul.f32 %v280, %v1396
        %v1419 = vmul.f32 %v282, %v1396
        %v1420 = vmul.f32 %v283, %v1396
        %v1421 = vmul.f32 %v285, %v1396
        %v1422 = vmul.f32 %v286, %v1396
        %v1423 = vmul.f32 %v288, %v1396
        %v1424 = vmul.f32 %v289, %v1396
        %v1425 = vmul.f32 %v291, %v1396
        %v1426 = vmul.f32 %v292, %v1396
        %v1427 = vmul.f32 %v294, %v1396
        %v1428 = vmul.f32 %v295, %v1396
        %v1429 = vadd.f32 %v1364, %v1397
        %v1430 = vadd.f32 %v1365, %v1398
        %v1431 = vadd.f32 %v1366, %v1399
        %v1432 = vadd.f32 %v1367, %v1400
        %v1433 = vadd.f32 %v1368, %v1401
        %v1434 = vadd.f32 %v1369, %v1402
        %v1435 = vadd.f32 %v1370, %v1403
        %v1436 = vadd.f32 %v1371, %v1404
        %v1437 = vadd.f32 %v1372, %v1405
        %v1438 = vadd.f32 %v1373, %v1406
        %v1439 = vadd.f32 %v1374, %v1407
        %v1440 = vadd.f32 %v1375, %v1408
        %v1441 = vadd.f32 %v1376, %v1409
        %v1442 = vadd.f32 %v1377, %v1410
        %v1443 = vadd.f32 %v1378, %v1411
        %v1444 = vadd.f32 %v1379, %v1412
        %v1445 = vadd.f32 %v1380, %v1413
        %v1446 = vadd.f32 %v1381, %v1414
        %v1447 = vadd.f32 %v1382, %v1415
        %v1448 = vadd.f32 %v1383, %v1416
        %v1449 = vadd.f32 %v1384, %v1417
        %v1450 = vadd.f32 %v1385, %v1418
        %v1451 = vadd.f32 %v1386, %v1419
        %v1452 = vadd.f32 %v1387, %v1420
        %v1453 = vadd.f32 %v1388, %v1421
        %v1454 = vadd.f32 %v1389, %v1422
        %v1455 = vadd.f32 %v1390, %v1423
        %v1456 = vadd.f32 %v1391, %v1424
        %v1457 = vadd.f32 %v1392, %v1425
        %v1458 = vadd.f32 %v1393, %v1426
        %v1459 = vadd.f32 %v1394, %v1427
        %v1460 = vadd.f32 %v1395, %v1428
        %v1461 = vperm.slane %v238, 7
        %v1462 = vmul.f32 %v249, %v1461
        %v1463 = vmul.f32 %v250, %v1461
        %v1464 = vmul.f32 %v251, %v1461
        %v1465 = vmul.f32 %v252, %v1461
        %v1466 = vmul.f32 %v253, %v1461
        %v1467 = vmul.f32 %v254, %v1461
        %v1468 = vmul.f32 %v255, %v1461
        %v1469 = vmul.f32 %v256, %v1461
        %v1470 = vmul.f32 %v257, %v1461
        %v1471 = vmul.f32 %v258, %v1461
        %v1472 = vmul.f32 %v259, %v1461
        %v1473 = vmul.f32 %v260, %v1461
        %v1474 = vmul.f32 %v261, %v1461
        %v1475 = vmul.f32 %v262, %v1461
        %v1476 = vmul.f32 %v263, %v1461
        %v1477 = vmul.f32 %v264, %v1461
        %v1478 = vmul.f32 %v265, %v1461
        %v1479 = vmul.f32 %v266, %v1461
        %v1480 = vmul.f32 %v267, %v1461
        %v1481 = vmul.f32 %v268, %v1461
        %v1482 = vmul.f32 %v269, %v1461
        %v1483 = vmul.f32 %v270, %v1461
        %v1484 = vmul.f32 %v271, %v1461
        %v1485 = vmul.f32 %v272, %v1461
        %v1486 = vmul.f32 %v273, %v1461
        %v1487 = vmul.f32 %v274, %v1461
        %v1488 = vmul.f32 %v275, %v1461
        %v1489 = vmul.f32 %v276, %v1461
        %v1490 = vmul.f32 %v277, %v1461
        %v1491 = vmul.f32 %v278, %v1461
        %v1492 = vmul.f32 %v279, %v1461
        %v1493 = vmul.f32 %v280, %v1461
        %v1494 = vmul.f32 %v281, %v1461
        %v1495 = vmul.f32 %v282, %v1461
        %v1496 = vmul.f32 %v283, %v1461
        %v1497 = vmul.f32 %v284, %v1461
        %v1498 = vmul.f32 %v285, %v1461
        %v1499 = vmul.f32 %v286, %v1461
        %v1500 = vmul.f32 %v287, %v1461
        %v1501 = vmul.f32 %v288, %v1461
        %v1502 = vmul.f32 %v289, %v1461
        %v1503 = vmul.f32 %v290, %v1461
        %v1504 = vmul.f32 %v291, %v1461
        %v1505 = vmul.f32 %v292, %v1461
        %v1506 = vmul.f32 %v293, %v1461
        %v1507 = vmul.f32 %v294, %v1461
        %v1508 = vmul.f32 %v295, %v1461
        %v1509 = vmul.f32 %v296, %v1461
        %v1558 = vrot.slane %v1462, 1
        %v1559 = vrot.slane %v1463, 1
        %v1560 = vsel %vm462, %v1558, %v1559
        %v1561 = vrot.slane %v1464, 1
        %v1562 = vsel %vm462, %v1559, %v1561
        %v1563 = vrot.slane %v1465, 1
        %v1564 = vrot.slane %v1466, 1
        %v1565 = vsel %vm462, %v1563, %v1564
        %v1566 = vrot.slane %v1467, 1
        %v1567 = vsel %vm462, %v1564, %v1566
        %v1568 = vrot.slane %v1468, 1
        %v1569 = vrot.slane %v1469, 1
        %v1570 = vsel %vm462, %v1568, %v1569
        %v1571 = vrot.slane %v1470, 1
        %v1572 = vsel %vm462, %v1569, %v1571
        %v1573 = vrot.slane %v1471, 1
        %v1574 = vrot.slane %v1472, 1
        %v1575 = vsel %vm462, %v1573, %v1574
        %v1576 = vrot.slane %v1473, 1
        %v1577 = vsel %vm462, %v1574, %v1576
        %v1578 = vrot.slane %v1474, 1
        %v1579 = vrot.slane %v1475, 1
        %v1580 = vsel %vm462, %v1578, %v1579
        %v1581 = vrot.slane %v1476, 1
        %v1582 = vsel %vm462, %v1579, %v1581
        %v1583 = vrot.slane %v1477, 1
        %v1584 = vrot.slane %v1478, 1
        %v1585 = vsel %vm462, %v1583, %v1584
        %v1586 = vrot.slane %v1479, 1
        %v1587 = vsel %vm462, %v1584, %v1586
        %v1588 = vrot.slane %v1480, 1
        %v1589 = vrot.slane %v1481, 1
        %v1590 = vsel %vm462, %v1588, %v1589
        %v1591 = vrot.slane %v1482, 1
        %v1592 = vsel %vm462, %v1589, %v1591
        %v1593 = vrot.slane %v1483, 1
        %v1594 = vrot.slane %v1484, 1
        %v1595 = vsel %vm462, %v1593, %v1594
        %v1596 = vrot.slane %v1485, 1
        %v1597 = vsel %vm462, %v1594, %v1596
        %v1598 = vrot.slane %v1486, 1
        %v1599 = vrot.slane %v1487, 1
        %v1600 = vsel %vm462, %v1598, %v1599
        %v1601 = vrot.slane %v1488, 1
        %v1602 = vsel %vm462, %v1599, %v1601
        %v1603 = vrot.slane %v1489, 1
        %v1604 = vrot.slane %v1490, 1
        %v1605 = vsel %vm462, %v1603, %v1604
        %v1606 = vrot.slane %v1491, 1
        %v1607 = vsel %vm462, %v1604, %v1606
        %v1608 = vrot.slane %v1492, 1
        %v1609 = vrot.slane %v1493, 1
        %v1610 = vsel %vm462, %v1608, %v1609
        %v1611 = vrot.slane %v1494, 1
        %v1612 = vsel %vm462, %v1609, %v1611
        %v1613 = vrot.slane %v1495, 1
        %v1614 = vrot.slane %v1496, 1
        %v1615 = vsel %vm462, %v1613, %v1614
        %v1616 = vrot.slane %v1497, 1
        %v1617 = vsel %vm462, %v1614, %v1616
        %v1618 = vrot.slane %v1498, 1
        %v1619 = vrot.slane %v1499, 1
        %v1620 = vsel %vm462, %v1618, %v1619
        %v1621 = vrot.slane %v1500, 1
        %v1622 = vsel %vm462, %v1619, %v1621
        %v1623 = vrot.slane %v1501, 1
        %v1624 = vrot.slane %v1502, 1
        %v1625 = vsel %vm462, %v1623, %v1624
        %v1626 = vrot.slane %v1503, 1
        %v1627 = vsel %vm462, %v1624, %v1626
        %v1628 = vrot.slane %v1504, 1
        %v1629 = vrot.slane %v1505, 1
        %v1630 = vsel %vm462, %v1628, %v1629
        %v1631 = vrot.slane %v1506, 1
        %v1632 = vsel %vm462, %v1629, %v1631
        %v1633 = vrot.slane %v1507, 1
        %v1634 = vrot.slane %v1508, 1
        %v1635 = vsel %vm462, %v1633, %v1634
        %v1636 = vrot.slane %v1509, 1
        %v1637 = vsel %vm462, %v1634, %v1636
        %v1670 = vadd.f32 %v1429, %v1560
        %v1671 = vadd.f32 %v1430, %v1562
        %v1672 = vadd.f32 %v1431, %v1565
        %v1673 = vadd.f32 %v1432, %v1567
        %v1674 = vadd.f32 %v1433, %v1570
        %v1675 = vadd.f32 %v1434, %v1572
        %v1676 = vadd.f32 %v1435, %v1575
        %v1677 = vadd.f32 %v1436, %v1577
        %v1678 = vadd.f32 %v1437, %v1580
        %v1679 = vadd.f32 %v1438, %v1582
        %v1680 = vadd.f32 %v1439, %v1585
        %v1681 = vadd.f32 %v1440, %v1587
        %v1682 = vadd.f32 %v1441, %v1590
        %v1683 = vadd.f32 %v1442, %v1592
        %v1684 = vadd.f32 %v1443, %v1595
        %v1685 = vadd.f32 %v1444, %v1597
        %v1686 = vadd.f32 %v1445, %v1600
        %v1687 = vadd.f32 %v1446, %v1602
        %v1688 = vadd.f32 %v1447, %v1605
        %v1689 = vadd.f32 %v1448, %v1607
        %v1690 = vadd.f32 %v1449, %v1610
        %v1691 = vadd.f32 %v1450, %v1612
        %v1692 = vadd.f32 %v1451, %v1615
        %v1693 = vadd.f32 %v1452, %v1617
        %v1694 = vadd.f32 %v1453, %v1620
        %v1695 = vadd.f32 %v1454, %v1622
        %v1696 = vadd.f32 %v1455, %v1625
        %v1697 = vadd.f32 %v1456, %v1627
        %v1698 = vadd.f32 %v1457, %v1630
        %v1699 = vadd.f32 %v1458, %v1632
        %v1700 = vadd.f32 %v1459, %v1635
        %v1701 = vadd.f32 %v1460, %v1637
        %v1702 = vperm.slane %v239, 0
        %v1703 = vmul.f32 %v249, %v1702
        %v1704 = vmul.f32 %v250, %v1702
        %v1705 = vmul.f32 %v251, %v1702
        %v1706 = vmul.f32 %v252, %v1702
        %v1707 = vmul.f32 %v253, %v1702
        %v1708 = vmul.f32 %v254, %v1702
        %v1709 = vmul.f32 %v255, %v1702
        %v1710 = vmul.f32 %v256, %v1702
        %v1711 = vmul.f32 %v257, %v1702
        %v1712 = vmul.f32 %v258, %v1702
        %v1713 = vmul.f32 %v259, %v1702
        %v1714 = vmul.f32 %v260, %v1702
        %v1715 = vmul.f32 %v261, %v1702
        %v1716 = vmul.f32 %v262, %v1702
        %v1717 = vmul.f32 %v263, %v1702
        %v1718 = vmul.f32 %v264, %v1702
        %v1719 = vmul.f32 %v265, %v1702
        %v1720 = vmul.f32 %v266, %v1702
        %v1721 = vmul.f32 %v267, %v1702
        %v1722 = vmul.f32 %v268, %v1702
        %v1723 = vmul.f32 %v269, %v1702
        %v1724 = vmul.f32 %v270, %v1702
        %v1725 = vmul.f32 %v271, %v1702
        %v1726 = vmul.f32 %v272, %v1702
        %v1727 = vmul.f32 %v273, %v1702
        %v1728 = vmul.f32 %v274, %v1702
        %v1729 = vmul.f32 %v275, %v1702
        %v1730 = vmul.f32 %v276, %v1702
        %v1731 = vmul.f32 %v277, %v1702
        %v1732 = vmul.f32 %v278, %v1702
        %v1733 = vmul.f32 %v279, %v1702
        %v1734 = vmul.f32 %v280, %v1702
        %v1735 = vmul.f32 %v281, %v1702
        %v1736 = vmul.f32 %v282, %v1702
        %v1737 = vmul.f32 %v283, %v1702
        %v1738 = vmul.f32 %v284, %v1702
        %v1739 = vmul.f32 %v285, %v1702
        %v1740 = vmul.f32 %v286, %v1702
        %v1741 = vmul.f32 %v287, %v1702
        %v1742 = vmul.f32 %v288, %v1702
        %v1743 = vmul.f32 %v289, %v1702
        %v1744 = vmul.f32 %v290, %v1702
        %v1745 = vmul.f32 %v291, %v1702
        %v1746 = vmul.f32 %v292, %v1702
        %v1747 = vmul.f32 %v293, %v1702
        %v1748 = vmul.f32 %v294, %v1702
        %v1749 = vmul.f32 %v295, %v1702
        %v1750 = vmul.f32 %v296, %v1702
        %v1799 = vrot.slane %v1703, 2
        %v1800 = vrot.slane %v1704, 2
        %v1801 = vsel %vm704, %v1799, %v1800
        %v1802 = vrot.slane %v1705, 2
        %v1803 = vsel %vm704, %v1800, %v1802
        %v1804 = vrot.slane %v1706, 2
        %v1805 = vrot.slane %v1707, 2
        %v1806 = vsel %vm704, %v1804, %v1805
        %v1807 = vrot.slane %v1708, 2
        %v1808 = vsel %vm704, %v1805, %v1807
        %v1809 = vrot.slane %v1709, 2
        %v1810 = vrot.slane %v1710, 2
        %v1811 = vsel %vm704, %v1809, %v1810
        %v1812 = vrot.slane %v1711, 2
        %v1813 = vsel %vm704, %v1810, %v1812
        %v1814 = vrot.slane %v1712, 2
        %v1815 = vrot.slane %v1713, 2
        %v1816 = vsel %vm704, %v1814, %v1815
        %v1817 = vrot.slane %v1714, 2
        %v1818 = vsel %vm704, %v1815, %v1817
        %v1819 = vrot.slane %v1715, 2
        %v1820 = vrot.slane %v1716, 2
        %v1821 = vsel %vm704, %v1819, %v1820
        %v1822 = vrot.slane %v1717, 2
        %v1823 = vsel %vm704, %v1820, %v1822
        %v1824 = vrot.slane %v1718, 2
        %v1825 = vrot.slane %v1719, 2
        %v1826 = vsel %vm704, %v1824, %v1825
        %v1827 = vrot.slane %v1720, 2
        %v1828 = vsel %vm704, %v1825, %v1827
        %v1829 = vrot.slane %v1721, 2
        %v1830 = vrot.slane %v1722, 2
        %v1831 = vsel %vm704, %v1829, %v1830
        %v1832 = vrot.slane %v1723, 2
        %v1833 = vsel %vm704, %v1830, %v1832
        %v1834 = vrot.slane %v1724, 2
        %v1835 = vrot.slane %v1725, 2
        %v1836 = vsel %vm704, %v1834, %v1835
        %v1837 = vrot.slane %v1726, 2
        %v1838 = vsel %vm704, %v1835, %v1837
        %v1839 = vrot.slane %v1727, 2
        %v1840 = vrot.slane %v1728, 2
        %v1841 = vsel %vm704, %v1839, %v1840
        %v1842 = vrot.slane %v1729, 2
        %v1843 = vsel %vm704, %v1840, %v1842
        %v1844 = vrot.slane %v1730, 2
        %v1845 = vrot.slane %v1731, 2
        %v1846 = vsel %vm704, %v1844, %v1845
        %v1847 = vrot.slane %v1732, 2
        %v1848 = vsel %vm704, %v1845, %v1847
        %v1849 = vrot.slane %v1733, 2
        %v1850 = vrot.slane %v1734, 2
        %v1851 = vsel %vm704, %v1849, %v1850
        %v1852 = vrot.slane %v1735, 2
        %v1853 = vsel %vm704, %v1850, %v1852
        %v1854 = vrot.slane %v1736, 2
        %v1855 = vrot.slane %v1737, 2
        %v1856 = vsel %vm704, %v1854, %v1855
        %v1857 = vrot.slane %v1738, 2
        %v1858 = vsel %vm704, %v1855, %v1857
        %v1859 = vrot.slane %v1739, 2
        %v1860 = vrot.slane %v1740, 2
        %v1861 = vsel %vm704, %v1859, %v1860
        %v1862 = vrot.slane %v1741, 2
        %v1863 = vsel %vm704, %v1860, %v1862
        %v1864 = vrot.slane %v1742, 2
        %v1865 = vrot.slane %v1743, 2
        %v1866 = vsel %vm704, %v1864, %v1865
        %v1867 = vrot.slane %v1744, 2
        %v1868 = vsel %vm704, %v1865, %v1867
        %v1869 = vrot.slane %v1745, 2
        %v1870 = vrot.slane %v1746, 2
        %v1871 = vsel %vm704, %v1869, %v1870
        %v1872 = vrot.slane %v1747, 2
        %v1873 = vsel %vm704, %v1870, %v1872
        %v1874 = vrot.slane %v1748, 2
        %v1875 = vrot.slane %v1749, 2
        %v1876 = vsel %vm704, %v1874, %v1875
        %v1877 = vrot.slane %v1750, 2
        %v1878 = vsel %vm704, %v1875, %v1877
        %v1911 = vadd.f32 %v1670, %v1801
        %v1912 = vadd.f32 %v1671, %v1803
        %v1913 = vadd.f32 %v1672, %v1806
        %v1914 = vadd.f32 %v1673, %v1808
        %v1915 = vadd.f32 %v1674, %v1811
        %v1916 = vadd.f32 %v1675, %v1813
        %v1917 = vadd.f32 %v1676, %v1816
        %v1918 = vadd.f32 %v1677, %v1818
        %v1919 = vadd.f32 %v1678, %v1821
        %v1920 = vadd.f32 %v1679, %v1823
        %v1921 = vadd.f32 %v1680, %v1826
        %v1922 = vadd.f32 %v1681, %v1828
        %v1923 = vadd.f32 %v1682, %v1831
        %v1924 = vadd.f32 %v1683, %v1833
        %v1925 = vadd.f32 %v1684, %v1836
        %v1926 = vadd.f32 %v1685, %v1838
        %v1927 = vadd.f32 %v1686, %v1841
        %v1928 = vadd.f32 %v1687, %v1843
        %v1929 = vadd.f32 %v1688, %v1846
        %v1930 = vadd.f32 %v1689, %v1848
        %v1931 = vadd.f32 %v1690, %v1851
        %v1932 = vadd.f32 %v1691, %v1853
        %v1933 = vadd.f32 %v1692, %v1856
        %v1934 = vadd.f32 %v1693, %v1858
        %v1935 = vadd.f32 %v1694, %v1861
        %v1936 = vadd.f32 %v1695, %v1863
        %v1937 = vadd.f32 %v1696, %v1866
        %v1938 = vadd.f32 %v1697, %v1868
        %v1939 = vadd.f32 %v1698, %v1871
        %v1940 = vadd.f32 %v1699, %v1873
        %v1941 = vadd.f32 %v1700, %v1876
        %v1942 = vadd.f32 %v1701, %v1878
        %v1943 = vmax.f32 %v1911, 0.0
        %v1944 = vmax.f32 %v1912, 0.0
        %v1945 = vmax.f32 %v1913, 0.0
        %v1946 = vmax.f32 %v1914, 0.0
        %v1947 = vmax.f32 %v1915, 0.0
        %v1948 = vmax.f32 %v1916, 0.0
        %v1949 = vmax.f32 %v1917, 0.0
        %v1950 = vmax.f32 %v1918, 0.0
        %v1951 = vmax.f32 %v1919, 0.0
        %v1952 = vmax.f32 %v1920, 0.0
        %v1953 = vmax.f32 %v1921, 0.0
        %v1954 = vmax.f32 %v1922, 0.0
        %v1955 = vmax.f32 %v1923, 0.0
        %v1956 = vmax.f32 %v1924, 0.0
        %v1957 = vmax.f32 %v1925, 0.0
        %v1958 = vmax.f32 %v1926, 0.0
        %v1959 = vmax.f32 %v1927, 0.0
        %v1960 = vmax.f32 %v1928, 0.0
        %v1961 = vmax.f32 %v1929, 0.0
        %v1962 = vmax.f32 %v1930, 0.0
        %v1963 = vmax.f32 %v1931, 0.0
        %v1964 = vmax.f32 %v1932, 0.0
        %v1965 = vmax.f32 %v1933, 0.0
        %v1966 = vmax.f32 %v1934, 0.0
        %v1967 = vmax.f32 %v1935, 0.0
        %v1968 = vmax.f32 %v1936, 0.0
        %v1969 = vmax.f32 %v1937, 0.0
        %v1970 = vmax.f32 %v1938, 0.0
        %v1971 = vmax.f32 %v1939, 0.0
        %v1972 = vmax.f32 %v1940, 0.0
        %v1973 = vmax.f32 %v1941, 0.0
        %v1974 = vmax.f32 %v1942, 0.0
        %v1975 = vpack.c.bf16 %v1944, %v1943
        %v1976 = vpack.c.bf16 %v1946, %v1945
        %v1977 = vpack.c.bf16 %v1948, %v1947
        %v1978 = vpack.c.bf16 %v1950, %v1949
        %v1979 = vpack.c.bf16 %v1952, %v1951
        %v1980 = vpack.c.bf16 %v1954, %v1953
        %v1981 = vpack.c.bf16 %v1956, %v1955
        %v1982 = vpack.c.bf16 %v1958, %v1957
        %v1983 = vpack.c.bf16 %v1960, %v1959
        %v1984 = vpack.c.bf16 %v1962, %v1961
        %v1985 = vpack.c.bf16 %v1964, %v1963
        %v1986 = vpack.c.bf16 %v1966, %v1965
        %v1987 = vpack.c.bf16 %v1968, %v1967
        %v1988 = vpack.c.bf16 %v1970, %v1969
        %v1989 = vpack.c.bf16 %v1972, %v1971
        %v1990 = vpack.c.bf16 %v1974, %v1973
        %v1991 = vld [vmem:[%s3] sm:$0xf]
        %v1992 = vld [vmem:[%s3 + $0x4] sm:$0xf]
        %v1993 = vld [vmem:[%s3 + $0x8] sm:$0xf]
        %v1994 = vld [vmem:[%s3 + $0xc] sm:$0xf]
        %v1995 = vld [vmem:[%s3 + $0x10] sm:$0xf]
        %v1996 = vld [vmem:[%s3 + $0x14] sm:$0xf]
        %v1997 = vld [vmem:[%s3 + $0x18] sm:$0xf]
        %v1998 = vld [vmem:[%s3 + $0x1c] sm:$0xf]
        %v1999 = vld [vmem:[%s3 + $0x20] sm:$0xf]
        %v2000 = vld [vmem:[%s3 + $0x24] sm:$0xf]
        %v2001 = vld [vmem:[%s3 + $0x28] sm:$0xf]
        %v2002 = vld [vmem:[%s3 + $0x2c] sm:$0xf]
        %v2003 = vld [vmem:[%s3 + $0x30] sm:$0xf]
        %v2004 = vld [vmem:[%s3 + $0x34] sm:$0xf]
        %v2005 = vld [vmem:[%s3 + $0x38] sm:$0xf]
        %v2006 = vld [vmem:[%s3 + $0x3c] sm:$0xf]
        %v2007 = vld [vmem:[%s4] sm:$0x1]
        %v2009 = vperm.slane %v2007, 0
        %v2027 = vunpack.c.l.b16 %v1991
        %v2028 = vunpack.c.l.b16 %v1992
        %v2029 = vunpack.c.l.b16 %v1993
        %v2030 = vunpack.c.l.b16 %v1994
        %v2031 = vunpack.c.l.b16 %v1995
        %v2032 = vunpack.c.l.b16 %v1996
        %v2033 = vunpack.c.l.b16 %v1997
        %v2034 = vunpack.c.l.b16 %v1998
        %v2035 = vunpack.c.l.b16 %v1999
        %v2036 = vunpack.c.l.b16 %v2000
        %v2037 = vunpack.c.l.b16 %v2001
        %v2038 = vunpack.c.l.b16 %v2002
        %v2039 = vunpack.c.l.b16 %v2003
        %v2040 = vunpack.c.l.b16 %v2004
        %v2041 = vunpack.c.l.b16 %v2005
        %v2042 = vunpack.c.l.b16 %v2006
        %v2043 = vpack.c.b16 %v2028, %v2027
        %v2044 = vpack.c.b16 %v2030, %v2029
        %v2045 = vpack.c.b16 %v2032, %v2031
        %v2046 = vpack.c.b16 %v2034, %v2033
        %v2047 = vpack.c.b16 %v2036, %v2035
        %v2048 = vpack.c.b16 %v2038, %v2037
        %v2049 = vpack.c.b16 %v2040, %v2039
        %v2050 = vpack.c.b16 %v2042, %v2041
        %2059 = vmatpush.bf16.msra.mxu0 %v2050
        %2060 = vmatpush.bf16.msra.mxu0 %v2049
        %2061 = vmatpush.bf16.msra.mxu0 %v2048
        %2062 = vmatpush.bf16.msra.mxu0 %v2047
        %2063 = vmatpush.bf16.msra.mxu0 %v2046
        %2064 = vmatpush.bf16.msra.mxu0 %v2045
        %2065 = vmatpush.bf16.msra.mxu0 %v2044
        %2066 = vmatpush.bf16.msra.mxu0 %v2043
        %2067 = vmatmul.bf16.gmra.mxu0 %v1975
        %v2068 = vpop.f32.mrf.mxu0
        %v2069 = vadd.f32 %v2009, %v2068
        %v2070 = vpop.f32.mrf.mxu0
        %v2071 = vadd.f32 %v2009, %v2070
        %2072 = vmatmul.bf16.gmra.mxu0 %v1976
        %v2073 = vpop.f32.mrf.mxu0
        %v2074 = vadd.f32 %v2009, %v2073
        %v2075 = vpop.f32.mrf.mxu0
        %v2076 = vadd.f32 %v2009, %v2075
        %2077 = vmatmul.bf16.gmra.mxu0 %v1977
        %v2078 = vpop.f32.mrf.mxu0
        %v2079 = vadd.f32 %v2009, %v2078
        %v2080 = vpop.f32.mrf.mxu0
        %v2081 = vadd.f32 %v2009, %v2080
        %2082 = vmatmul.bf16.gmra.mxu0 %v1978
        %v2083 = vpop.f32.mrf.mxu0
        %v2084 = vadd.f32 %v2009, %v2083
        %v2085 = vpop.f32.mrf.mxu0
        %v2086 = vadd.f32 %v2009, %v2085
        %2087 = vmatmul.bf16.gmra.mxu0 %v1979
        %v2088 = vpop.f32.mrf.mxu0
        %v2089 = vadd.f32 %v2009, %v2088
        %v2090 = vpop.f32.mrf.mxu0
        %v2091 = vadd.f32 %v2009, %v2090
        %2092 = vmatmul.bf16.gmra.mxu0 %v1980
        %v2093 = vpop.f32.mrf.mxu0
        %v2094 = vadd.f32 %v2009, %v2093
        %v2095 = vpop.f32.mrf.mxu0
        %v2096 = vadd.f32 %v2009, %v2095
        %2097 = vmatmul.bf16.gmra.mxu0 %v1981
        %v2098 = vpop.f32.mrf.mxu0
        %v2099 = vadd.f32 %v2009, %v2098
        %v2100 = vpop.f32.mrf.mxu0
        %v2101 = vadd.f32 %v2009, %v2100
        %2102 = vmatmul.bf16.gmra.mxu0 %v1982
        %v2103 = vpop.f32.mrf.mxu0
        %v2104 = vadd.f32 %v2009, %v2103
        %v2105 = vpop.f32.mrf.mxu0
        %v2106 = vadd.f32 %v2009, %v2105
        %2107 = vmatmul.bf16.gmra.mxu0 %v1983
        %v2108 = vpop.f32.mrf.mxu0
        %v2109 = vadd.f32 %v2009, %v2108
        %v2110 = vpop.f32.mrf.mxu0
        %v2111 = vadd.f32 %v2009, %v2110
        %2112 = vmatmul.bf16.gmra.mxu0 %v1984
        %v2113 = vpop.f32.mrf.mxu0
        %v2114 = vadd.f32 %v2009, %v2113
        %v2115 = vpop.f32.mrf.mxu0
        %v2116 = vadd.f32 %v2009, %v2115
        %2117 = vmatmul.bf16.gmra.mxu0 %v1985
        %v2118 = vpop.f32.mrf.mxu0
        %v2119 = vadd.f32 %v2009, %v2118
        %v2120 = vpop.f32.mrf.mxu0
        %v2121 = vadd.f32 %v2009, %v2120
        %2122 = vmatmul.bf16.gmra.mxu0 %v1986
        %v2123 = vpop.f32.mrf.mxu0
        %v2124 = vadd.f32 %v2009, %v2123
        %v2125 = vpop.f32.mrf.mxu0
        %v2126 = vadd.f32 %v2009, %v2125
        %2127 = vmatmul.bf16.gmra.mxu0 %v1987
        %v2128 = vpop.f32.mrf.mxu0
        %v2129 = vadd.f32 %v2009, %v2128
        %v2130 = vpop.f32.mrf.mxu0
        %v2131 = vadd.f32 %v2009, %v2130
        %2132 = vmatmul.bf16.gmra.mxu0 %v1988
        %v2133 = vpop.f32.mrf.mxu0
        %v2134 = vadd.f32 %v2009, %v2133
        %v2135 = vpop.f32.mrf.mxu0
        %v2136 = vadd.f32 %v2009, %v2135
        %2137 = vmatmul.bf16.gmra.mxu0 %v1989
        %v2138 = vpop.f32.mrf.mxu0
        %v2139 = vadd.f32 %v2009, %v2138
        %v2140 = vpop.f32.mrf.mxu0
        %v2141 = vadd.f32 %v2009, %v2140
        %2142 = vmatmul.bf16.gmra.mxu0 %v1990
        %v2143 = vpop.f32.mrf.mxu0
        %v2144 = vadd.f32 %v2009, %v2143
        %v2145 = vpop.f32.mrf.mxu0
        %v2146 = vadd.f32 %v2009, %v2145
        %2147 = vdwg.mxu0
        %v2148 = vmax.f32 %v2069, 0.0
        %v2149 = vmax.f32 %v2071, 0.0
        %v2150 = vmax.f32 %v2074, 0.0
        %v2151 = vmax.f32 %v2076, 0.0
        %v2152 = vmax.f32 %v2079, 0.0
        %v2153 = vmax.f32 %v2081, 0.0
        %v2154 = vmax.f32 %v2084, 0.0
        %v2155 = vmax.f32 %v2086, 0.0
        %v2156 = vmax.f32 %v2089, 0.0
        %v2157 = vmax.f32 %v2091, 0.0
        %v2158 = vmax.f32 %v2094, 0.0
        %v2159 = vmax.f32 %v2096, 0.0
        %v2160 = vmax.f32 %v2099, 0.0
        %v2161 = vmax.f32 %v2101, 0.0
        %v2162 = vmax.f32 %v2104, 0.0
        %v2163 = vmax.f32 %v2106, 0.0
        %v2164 = vmax.f32 %v2109, 0.0
        %v2165 = vmax.f32 %v2111, 0.0
        %v2166 = vmax.f32 %v2114, 0.0
        %v2167 = vmax.f32 %v2116, 0.0
        %v2168 = vmax.f32 %v2119, 0.0
        %v2169 = vmax.f32 %v2121, 0.0
        %v2170 = vmax.f32 %v2124, 0.0
        %v2171 = vmax.f32 %v2126, 0.0
        %v2172 = vmax.f32 %v2129, 0.0
        %v2173 = vmax.f32 %v2131, 0.0
        %v2174 = vmax.f32 %v2134, 0.0
        %v2175 = vmax.f32 %v2136, 0.0
        %v2176 = vmax.f32 %v2139, 0.0
        %v2177 = vmax.f32 %v2141, 0.0
        %v2178 = vmax.f32 %v2144, 0.0
        %v2179 = vmax.f32 %v2146, 0.0
        %2180 = vst [vmem:[%s231] sm:$0xff] %v2148
        %2181 = vst [vmem:[%s231 + $0x8] sm:$0xff] %v2149
        %2182 = vst [vmem:[%s231 + $0x10] sm:$0xff] %v2150
        %2183 = vst [vmem:[%s231 + $0x18] sm:$0xff] %v2151
        %2184 = vst [vmem:[%s231 + $0x20] sm:$0xff] %v2152
        %2185 = vst [vmem:[%s231 + $0x28] sm:$0xff] %v2153
        %2186 = vst [vmem:[%s231 + $0x30] sm:$0xff] %v2154
        %2187 = vst [vmem:[%s231 + $0x38] sm:$0xff] %v2155
        %2188 = vst [vmem:[%s231 + $0x40] sm:$0xff] %v2156
        %2189 = vst [vmem:[%s231 + $0x48] sm:$0xff] %v2157
        %2190 = vst [vmem:[%s231 + $0x50] sm:$0xff] %v2158
        %2191 = vst [vmem:[%s231 + $0x58] sm:$0xff] %v2159
        %2192 = vst [vmem:[%s231 + $0x60] sm:$0xff] %v2160
        %2193 = vst [vmem:[%s231 + $0x68] sm:$0xff] %v2161
        %2194 = vst [vmem:[%s231 + $0x70] sm:$0xff] %v2162
        %2195 = vst [vmem:[%s231 + $0x78] sm:$0xff] %v2163
        %2196 = vst [vmem:[%s231 + $0x80] sm:$0xff] %v2164
        %2197 = vst [vmem:[%s231 + $0x88] sm:$0xff] %v2165
        %2198 = vst [vmem:[%s231 + $0x90] sm:$0xff] %v2166
        %2199 = vst [vmem:[%s231 + $0x98] sm:$0xff] %v2167
        %2200 = vst [vmem:[%s231 + $0xa0] sm:$0xff] %v2168
        %2201 = vst [vmem:[%s231 + $0xa8] sm:$0xff] %v2169
        %2202 = vst [vmem:[%s231 + $0xb0] sm:$0xff] %v2170
        %2203 = vst [vmem:[%s231 + $0xb8] sm:$0xff] %v2171
        %2204 = vst [vmem:[%s231 + $0xc0] sm:$0xff] %v2172
        %2205 = vst [vmem:[%s231 + $0xc8] sm:$0xff] %v2173
        %2206 = vst [vmem:[%s231 + $0xd0] sm:$0xff] %v2174
        %2207 = vst [vmem:[%s231 + $0xd8] sm:$0xff] %v2175
        %2208 = vst [vmem:[%s231 + $0xe0] sm:$0xff] %v2176
        %2209 = vst [vmem:[%s231 + $0xe8] sm:$0xff] %v2177
        %2210 = vst [vmem:[%s231 + $0xf0] sm:$0xff] %v2178
        %2211 = vst [vmem:[%s231 + $0xf8] sm:$0xff] %v2179
        %s2212 = sand.u32 %s151, 1
        %s2213 = scalar_lea.sflag [#allocation3], %s2212
        %s2214 = sand.u32 %s151, 1
        %s2215 = smul.addr %s2214, 256
        %s2216 = scalar_lea.vmem [#allocation2], %s2215
        // Predicated region
        $region41: #{tpu_custom_call.1} parent=39 // pred_check
          %p2217 = pneg %p161
        $region42: #{tpu_custom_call.1} parent=39 // pred_check_branch
          %2219 = sbr.rel (%p2217) target = $region44
        $region43: #{tpu_custom_call.1} parent=39 // pred_region
          %2221 = vsyncadd %s2213, 0
          %s2222 = smul.addr %s24, 32
          %s2223 = smul.addr %s23, 32
          %s2224 = sadd.s32 %s2222, %s2223
          %s2225 = smul.addr %s2224, 8
          %s2226 = scalar_lea.hbm %s5, %s2225
          %s2227 = sshll.u32 %s2216, 4
          %s2228 = int_to_ptr.vmem [resolvable:$true] %s2227
          %s2229 = sshll.u32 %s2226, 4
          %s2230 = int_to_ptr.hbm [resolvable:$true] %s2229
          %2235 = dma.vmem_to_hbm [thread:$0]  %s2228, 4096, %s2230, %s2213, 128, 128, 8
        $region44: #{tpu_custom_call.1} parent=39 // pred_fallthru
          _
      $region40: #{tpu_custom_call.1} parent=5 // pred_fallthru
        _
      %p2236 = scmp.le.s32.totalorder 2, %s14
      // Predicated region
      $region45: #{tpu_custom_call.1} parent=5 // pred_check
        %p2237 = pneg %p2236
      $region46: #{tpu_custom_call.1} parent=5 // pred_check_branch
        %2239 = sbr.rel (%p2237) target = $region48
      $region47: #{tpu_custom_call.1} parent=5 // pred_region
        %s2240 = ssub.s32 %s14, 2
        // Predicated region
        $region49: #{tpu_custom_call.1} parent=47 // pred_check
          %p2241 = pneg %p167
        $region50: #{tpu_custom_call.1} parent=47 // pred_check_branch
          %2243 = sbr.rel (%p2241) target = $region52
        $region51: #{tpu_custom_call.1} parent=47 // pred_region
          %s2244 = sand.u32 %s152, 1
          %s2245 = scalar_lea.sflag [#allocation3], %s2244
          %s2246 = sand.u32 %s152, 1
          %s2247 = smul.addr %s2246, 256
          %s2248 = scalar_lea.vmem [#allocation2], %s2247
          %2250 = dma.done %s2245, 4096
        $region52: #{tpu_custom_call.1} parent=47 // pred_fallthru
          _
      $region48: #{tpu_custom_call.1} parent=5 // pred_fallthru
        _
    $region6: #{tpu_custom_call.1} parent=1 // loop_footer
      %s18 = sadd.s32 1, %s14
    $region7: #{tpu_custom_call.1} parent=1 // loop_footer_branch
      %13 = sbr.rel target = $region3
    $region8: #{tpu_custom_call.1} parent=1 // loop_exit
      _
    %2251 = vsyncpa [#allocation3], 1
    %s2252 = scalar_lea.sflag [#allocation3], 1
    %2253 = vsyncpa %s2252, 1

</llo_original>
